<compile_context>
chip_gen: v6e
topology: v6e:2x2x1
jax: 0.10.0
libtpu: 0.0.40
codegen_flags: <defaults>
</compile_context>

<pallas_src>
import functools
import math

import numpy as np
import jax
import jax.numpy as jnp
from jax import lax
from jax.experimental import pallas as pl
from jax.experimental.pallas import tpu as pltpu


# ----------------------------------------------------------------------------
# helpers shared by the wrapper and the numpy reference
# ----------------------------------------------------------------------------
def _make_bins(num_steps):
    step = 2.0 / (num_steps - 1)
    eps = 1.0 / num_steps
    # mirrors torch.arange(-1, 1 + step, step)
    t = np.arange(-1.0, 1.0 + step, step).astype(np.float32)
    return t, step, eps


def _round_up(x, m):
    return -(-x // m) * m


# ----------------------------------------------------------------------------
# fused kernel: sim tile (MXU) -> soft-binned (TB, 6) accumulator -> loss
# ----------------------------------------------------------------------------
def _hist_loss_kernel(bi_ref, bj_ref,                     # scalar prefetch
                      er_ref, ec_ref, crow_ref, ccol_ref,  # inputs
                      loss_ref, cnt_ref,                   # outputs
                      acc_ref, sims_ref,                   # scratch
                      *, n_valid, inv_step):
    t = pl.program_id(0)
    tm, tn = sims_ref.shape
    tb = acc_ref.shape[0]

    @pl.when(t == 0)
    def _init():
        acc_ref[...] = jnp.zeros_like(acc_ref)

    bi = bi_ref[t]
    bj = bj_ref[t]

    # --- clamped cosine similarities for this (tm, tn) tile ------------------
    # embeddings are already L2-normalized; one MXU matmul per tile.
    s = lax.dot_general(er_ref[...], ec_ref[...],
                        (((1,), (1,)), ((), ())),
                        preferred_element_type=jnp.float32)
    sims_ref[...] = jnp.clip(s, -1.0 + 1e-6, 1.0 - 1e-6)

    # --- loop-invariant values (hoisted; JAX does not CSE broadcasts) --------
    ccol = ccol_ref[...]                                             # (1, tn)
    col_g = bj * tn + lax.broadcasted_iota(jnp.int32, (1, tn), 1)    # (1, tn)
    col_ok = col_g < n_valid
    bins = lax.broadcasted_iota(jnp.int32, (tb, tn), 0)              # (tb, tn)
    chi = lax.broadcasted_iota(jnp.int32, (6, tn), 0)                # (6, tn)
    pos_ch = (chi == 0) | (chi == 1) | (chi == 4)
    frc_ch = (chi == 1) | (chi == 3)
    cnt_ch = chi >= 4
    row0 = bi * tm

    # --- per-row soft binning -------------------------------------------------
    # The per-pair elementwise math runs on (1, tn) rows (small fraction of the
    # work); the heavy parts -- one-hot build (tb, tn) and the MXU contraction
    # -- are fully 2-D / lane-dense.
    def row_body(r, carry):
        row_g = row0 + r

        # skip rows with no valid (strictly-upper, in-range) pair at all
        @pl.when(jnp.logical_and(row_g + 1 < n_valid,
                                 row_g < bj * tn + tn - 1))
        def _():
            srow = sims_ref[pl.ds(r, 1), :]                  # (1, tn) f32
            crow = crow_ref[pl.ds(r, 1), :]                  # (1, 1) int32

            valid = (col_g > row_g) & col_ok
            eq = crow == ccol
            pos = jnp.where(valid & eq, 1.0, 0.0)            # (1, tn) f32
            neg = jnp.where(valid & jnp.logical_not(eq), 1.0, 0.0)

            # linear soft binning: floor bin gets (1-frac), floor+1 gets frac
            fidx = jnp.floor((srow + (1.0 - 1e-6)) * inv_step)
            frac = (srow + 1.0) * inv_step - fidx

            # 0/1 one-hot (exact in bf16); compares stay in int32
            onehot = (bins == fidx.astype(jnp.int32)).astype(jnp.bfloat16)

            # 6 weight channels:
            #   [pos*(1-frac), pos*frac, neg*(1-frac), neg*frac, pos, neg]
            msk = jnp.where(pos_ch, pos, neg)                       # (6, tn)
            wgt = jnp.where(cnt_ch, 1.0,
                            jnp.where(frc_ch, frac, 1.0 - frac))
            w6 = (msk * wgt).astype(jnp.bfloat16)

            acc_ref[...] += lax.dot_general(
                onehot, w6, (((1,), (1,)), ((), ())),
                preferred_element_type=jnp.float32)                 # (tb, 6)
        return carry

    lax.fori_loop(0, tm, row_body, 0)

    # --- finalize: normalize, CDF, loss --------------------------------------
    @pl.when(t == pl.num_programs(0) - 1)
    def _finalize():
        acc = acc_ref[...]
        bp, ap = acc[:, 0:1], acc[:, 1:2]        # pos mass: floor / floor+1
        bn, an = acc[:, 2:3], acc[:, 3:4]        # neg mass: floor / floor+1
        pos_size = jnp.sum(acc[:, 4:5], keepdims=True)   # exact pair counts
        neg_size = jnp.sum(acc[:, 5:6], keepdims=True)
        inv_ps = jnp.where(pos_size > 0, 1.0 / pos_size, 0.0)
        inv_ns = jnp.where(neg_size > 0, 1.0 / neg_size, 0.0)

        r = lax.broadcasted_iota(jnp.int32, (tb, tb), 0)
        c = lax.broadcasted_iota(jnp.int32, (tb, tb), 1)
        l_le = (c <= r).astype(jnp.float32)      # inclusive prefix sum
        l_lt = (c < r).astype(jnp.float32)       # prefix sum with +1-bin shift
        sh1 = (c == r - 1).astype(jnp.float32)   # shift-down-by-one

        # cdf[k] = sum_{k'<=k} hp[k'],  hp[k] = (bp[k] + ap[k-1]) / pos_size
        cdf = (jnp.dot(l_le, bp, preferred_element_type=jnp.float32)
               + jnp.dot(l_lt, ap, preferred_element_type=jnp.float32)) * inv_ps
        # hn[k] = (bn[k] + an[k-1]) / neg_size
        hn = (bn + jnp.dot(sh1, an, preferred_element_type=jnp.float32)) * inv_ns

        loss_ref[...] = jnp.sum(hn * cdf, keepdims=True)
        cnt_ref[...] = pos_size + neg_size


# ----------------------------------------------------------------------------
# wrapper
# ----------------------------------------------------------------------------
def histogram_loss(embeddings, classes, num_steps=100, *,
                   tile_m=512, tile_n=256, sim_dtype=None):
    """HistogramLoss forward. tile_m / tile_n must be multiples of 128."""
    n, d = embeddings.shape
    assert n >= 2, "need at least two embeddings"
    t_np, step, _eps = _make_bins(num_steps)
    tsize = int(t_np.shape[0])
    tb = _round_up(tsize, 8)

    # MXU input dtype for the similarity matmul: keep the caller's precision
    # (bf16 embeddings -> bf16 MXU + half the HBM bytes; f32 stays f32 so the
    # clamped sims are bit-faithful to the reference).
    if sim_dtype is None:
        sim_dtype = jnp.bfloat16 if embeddings.dtype == jnp.bfloat16 else jnp.float32

    # normalize ONCE (plain XLA), no per-tile rsqrt in the kernel
    emb = embeddings.astype(jnp.float32)
    emb = emb * lax.rsqrt(jnp.sum(emb * emb, axis=1, keepdims=True))
    emb = emb.astype(sim_dtype)

    npad0 = _round_up(max(n, 128), 128)
    tm = min(tile_m, npad0)
    tn = min(tile_n, npad0)
    npad = _round_up(n, (tm * tn) // math.gcd(tm, tn))

    cls = classes.astype(jnp.int32)
    if npad != n:
        emb = jnp.concatenate([emb, jnp.zeros((npad - n, d), sim_dtype)], axis=0)
        cls = jnp.concatenate([cls, jnp.full((npad - n,), -1, jnp.int32)], axis=0)
    cls_row = cls.reshape(npad, 1)
    cls_col = cls.reshape(1, npad)

    # host-side upper-triangular tile schedule (ordered by bi so the tall er
    # block stays VMEM-resident across its whole row of tiles)
    gi, gj = npad // tm, npad // tn
    bi_list, bj_list = [], []
    for bi in range(gi):
        if bi * tm >= n:
            break
        for bj in range(gj):
            if bj * tn >= n:
                break
            if bj * tn + tn - 1 > bi * tm:      # tile contains some col > row
                bi_list.append(bi)
                bj_list.append(bj)
    num_tiles = len(bi_list)
    bi_arr = jnp.asarray(bi_list, dtype=jnp.int32)
    bj_arr = jnp.asarray(bj_list, dtype=jnp.int32)

    kern = functools.partial(_hist_loss_kernel,
                             n_valid=n, inv_step=float(1.0 / step))

    loss, cnt = pl.pallas_call(
        kern,
        out_shape=(jax.ShapeDtypeStruct((1, 1), jnp.float32),
                   jax.ShapeDtypeStruct((1, 1), jnp.float32)),
        grid_spec=pltpu.PrefetchScalarGridSpec(
            num_scalar_prefetch=2,
            grid=(num_tiles,),
            in_specs=[
                pl.BlockSpec((tm, d), lambda t, bi, bj: (bi[t], 0)),   # er
                pl.BlockSpec((tn, d), lambda t, bi, bj: (bj[t], 0)),   # ec
                pl.BlockSpec((tm, 1), lambda t, bi, bj: (bi[t], 0)),   # row cls
                pl.BlockSpec((1, tn), lambda t, bi, bj: (0, bj[t])),   # col cls
            ],
            out_specs=(pl.BlockSpec((1, 1), lambda t, bi, bj: (0, 0)),
                       pl.BlockSpec((1, 1), lambda t, bi, bj: (0, 0))),
            scratch_shapes=[pltpu.VMEM((tb, 6), jnp.float32),
                            pltpu.VMEM((tm, tn), jnp.float32)]),
        compiler_params=pltpu.CompilerParams(
            dimension_semantics=("arbitrary",)),
    )(bi_arr, bj_arr, emb, emb, cls_row, cls_col)

    return loss[0, 0], jnp.round(cnt[0, 0]).astype(jnp.int32)


# ----------------------------------------------------------------------------
# pure numpy reference (faithful port of the PyTorch forward)
# ----------------------------------------------------------------------------
def ref_histogram_loss_np(emb, classes, num_steps=100):
    t_np, step, eps = _make_bins(num_steps)
    t = t_np.reshape(-1, 1)
    tsize = t.shape[0]
    n = classes.shape[0]

    eq = classes[None, :] == classes[:, None]
    a = emb.astype(np.float32)
    an = a / np.linalg.norm(a, axis=1, keepdims=True)
    dists = an @ an.T

    s_inds = np.triu(np.ones((n, n), dtype=bool), 1)
    pos = eq[s_inds]
    pos_inds = np.tile(pos, (tsize, 1))
    neg_inds = ~pos_inds
    pos_size = int(pos.sum())
    neg_size = int((~pos).sum())

    s = dists[s_inds].reshape(1, -1)
    s = np.clip(s, -1 + 1e-6, 1 - 1e-6)
    s_repeat = np.tile(s, (tsize, 1)).astype(np.float32)
    s_floor = (np.floor((s_repeat + 1.0 - 1e-6) / step) * step - 1.0).astype(np.float32)

    def hist(inds, size):
        sr = s_repeat.copy()
        indsa = (np.abs(s_floor - (t - step)) < eps) & inds
        zeros = np.zeros((1, indsa.shape[1]), dtype=bool)
        indsb = np.concatenate([indsa, zeros])[1:, :]
        sr[~(indsb | indsa)] = 0
        sr[indsa] = ((s_repeat - t + step)[indsa]) / step
        sr[indsb] = ((-s_repeat + t + step)[indsb]) / step
        return sr.sum(1) / size

    hp = hist(pos_inds, pos_size)
    hn = hist(neg_inds, neg_size)
    cdf = np.cumsum(hp)
    loss = float(np.sum(hn * cdf))
    return loss, pos_size + neg_size


# ----------------------------------------------------------------------------
if __name__ == "__main__":
    N, D = 16, 32
    NUM_STEPS = 100

    key = jax.random.PRNGKey(0)
    embeddings = jax.random.normal(key, (N, D), dtype=jnp.float32)
    classes = jnp.arange(N, dtype=jnp.int32) % 4   # 4 samples per class

    loss, count = histogram_loss(embeddings, classes, num_steps=NUM_STEPS)
    loss = jax.block_until_ready(loss)
    count = jax.block_until_ready(count)

    ref_loss, ref_count = ref_histogram_loss_np(
        np.asarray(embeddings), np.asarray(classes), NUM_STEPS)

    assert int(count) == int(ref_count), (int(count), int(ref_count))
    np.testing.assert_allclose(float(loss), float(ref_loss), rtol=1e-3, atol=1e-3)

    print("KERNEL_OK")
</pallas_src>

<mosaic_0001>
module attributes {stable_mosaic.version = 11 : i64} {
  func.func @_hist_loss_kernel(%arg0: i32, %arg1: memref<1xi32, #tpu.memory_space<smem>>, %arg2: memref<1xi32, #tpu.memory_space<smem>>, %arg3: memref<128x32xf32, #tpu.memory_space<vmem>>, %arg4: memref<128x32xf32, #tpu.memory_space<vmem>>, %arg5: memref<128x1xi32, #tpu.memory_space<vmem>>, %arg6: memref<1x128xi32, #tpu.memory_space<vmem>>, %arg7: memref<1x1xf32, #tpu.memory_space<vmem>>, %arg8: memref<1x1xf32, #tpu.memory_space<vmem>>, %arg9: memref<104x6xf32, #tpu.memory_space<vmem>>, %arg10: memref<128x128xf32, #tpu.memory_space<vmem>>) attributes {dimension_semantics = [#tpu.dimension_semantics<arbitrary>], iteration_bounds = array<i64: 1>, scalar_prefetch = 2 : i64, scratch_operands = 2 : i64, tpu.core_type = #tpu.core_type<tc>, window_params = [{transform_indices = @transform_0, window_bounds = array<i64: 128, 32>}, {transform_indices = @transform_1, window_bounds = array<i64: 128, 32>}, {transform_indices = @transform_2, window_bounds = array<i64: 128, 1>}, {transform_indices = @transform_3, window_bounds = array<i64: 1, 128>}, {pipeline_mode = #tpu.pipeline_mode<synchronous>, transform_indices = @transform_4, window_bounds = array<i64: 1, 1>}, {pipeline_mode = #tpu.pipeline_mode<synchronous>, transform_indices = @transform_5, window_bounds = array<i64: 1, 1>}]} {
    %c0_i32 = arith.constant 0 : i32
    %0 = arith.cmpi eq, %arg0, %c0_i32 : i32
    %1 = arith.extui %0 : i1 to i32
    %c0_i32_0 = arith.constant 0 : i32
    %2 = arith.cmpi ne, %1, %c0_i32_0 : i32
    scf.if %2 {
      %cst_20 = arith.constant 0.000000e+00 : f32
      %44 = vector.broadcast %cst_20 : f32 to vector<104x6xf32>
      %c0_21 = arith.constant 0 : index
      %c0_22 = arith.constant 0 : index
      %45 = vector.load %arg9[%c0_21, %c0_22] : memref<104x6xf32, #tpu.memory_space<vmem>>, vector<104x6xf32>
      tpu.vector_store %arg9[%c0_21, %c0_22], %44 {strides = array<i32>} : memref<104x6xf32, #tpu.memory_space<vmem>>, vector<104x6xf32>,
    } else {
    }
    %3 = arith.index_cast %arg0 : i32 to index
    %4 = memref.load %arg1[%3] : memref<1xi32, #tpu.memory_space<smem>>
    %5 = arith.index_cast %arg0 : i32 to index
    %6 = memref.load %arg2[%5] : memref<1xi32, #tpu.memory_space<smem>>
    %c0 = arith.constant 0 : index
    %c0_1 = arith.constant 0 : index
    %7 = vector.load %arg3[%c0, %c0_1] : memref<128x32xf32, #tpu.memory_space<vmem>>, vector<128x32xf32>
    %c0_2 = arith.constant 0 : index
    %c0_3 = arith.constant 0 : index
    %8 = vector.load %arg4[%c0_2, %c0_3] : memref<128x32xf32, #tpu.memory_space<vmem>>, vector<128x32xf32>
    %cst = arith.constant dense<0.000000e+00> : vector<128x128xf32>
    %9 = tpu.matmul %7, %8, %cst {dimension_numbers = #tpu.dot_dimension_numbers<[1], [1], [0], [0], [0, 0, 1, 0], [], []>} : vector<128x32xf32>, vector<128x32xf32>, vector<128x128xf32> -> vector<128x128xf32>
    %cst_4 = arith.constant -0.999998986 : f32
    %cst_5 = arith.constant 0.999998986 : f32
    %10 = vector.broadcast %cst_4 : f32 to vector<128x128xf32>
    %11 = arith.maximumf %10, %9 : vector<128x128xf32>
    %12 = vector.broadcast %cst_5 : f32 to vector<128x128xf32>
    %13 = arith.minimumf %12, %11 : vector<128x128xf32>
    %c0_6 = arith.constant 0 : index
    %c0_7 = arith.constant 0 : index
    %14 = vector.load %arg10[%c0_6, %c0_7] : memref<128x128xf32, #tpu.memory_space<vmem>>, vector<128x128xf32>
    tpu.vector_store %arg10[%c0_6, %c0_7], %13 {strides = array<i32>} : memref<128x128xf32, #tpu.memory_space<vmem>>, vector<128x128xf32>,
    %c0_8 = arith.constant 0 : index
    %c0_9 = arith.constant 0 : index
    %15 = vector.load %arg6[%c0_8, %c0_9] : memref<1x128xi32, #tpu.memory_space<vmem>>, vector<1x128xi32>
    %c128_i32 = arith.constant 128 : i32
    %16 = arith.muli %6, %c128_i32 : i32
    %17 = tpu.iota {dimensions = array<i32: 1>} : vector<1x128xi32>
    %18 = vector.broadcast %16 : i32 to vector<1x128xi32>
    %19 = arith.addi %18, %17 : vector<1x128xi32>
    %c16_i32 = arith.constant 16 : i32
    %20 = vector.broadcast %c16_i32 : i32 to vector<1x128xi32>
    %21 = arith.cmpi slt, %19, %20 : vector<1x128xi32>
    %22 = tpu.iota {dimensions = array<i32: 0>} : vector<104x128xi32>
    %23 = tpu.iota {dimensions = array<i32: 0>} : vector<6x128xi32>
    %c0_i32_10 = arith.constant 0 : i32
    %24 = vector.broadcast %c0_i32_10 : i32 to vector<6x128xi32>
    %25 = arith.cmpi eq, %23, %24 : vector<6x128xi32>
    %c1_i32 = arith.constant 1 : i32
    %26 = vector.broadcast %c1_i32 : i32 to vector<6x128xi32>
    %27 = arith.cmpi eq, %23, %26 : vector<6x128xi32>
    %28 = arith.ori %25, %27 : vector<6x128xi1>
    %c4_i32 = arith.constant 4 : i32
    %29 = vector.broadcast %c4_i32 : i32 to vector<6x128xi32>
    %30 = arith.cmpi eq, %23, %29 : vector<6x128xi32>
    %31 = arith.ori %28, %30 : vector<6x128xi1>
    %c1_i32_11 = arith.constant 1 : i32
    %32 = vector.broadcast %c1_i32_11 : i32 to vector<6x128xi32>
    %33 = arith.cmpi eq, %23, %32 : vector<6x128xi32>
    %c3_i32 = arith.constant 3 : i32
    %34 = vector.broadcast %c3_i32 : i32 to vector<6x128xi32>
    %35 = arith.cmpi eq, %23, %34 : vector<6x128xi32>
    %36 = arith.ori %33, %35 : vector<6x128xi1>
    %c4_i32_12 = arith.constant 4 : i32
    %37 = vector.broadcast %c4_i32_12 : i32 to vector<6x128xi32>
    %38 = arith.cmpi sge, %23, %37 : vector<6x128xi32>
    %c128_i32_13 = arith.constant 128 : i32
    %39 = arith.muli %4, %c128_i32_13 : i32
    %c0_i32_14 = arith.constant 0 : i32
    %c128_i32_15 = arith.constant 128 : i32
    %40 = arith.addi %c0_i32_14, %c128_i32_15 : i32
    %c1_i32_16 = arith.constant 1 : i32
    scf.for %arg11 = %c0_i32_14 to %40 step %c1_i32_16  : i32 {
      %44 = arith.addi %39, %arg11 : i32
      %c1_i32_20 = arith.constant 1 : i32
      %45 = arith.addi %44, %c1_i32_20 : i32
      %c16_i32_21 = arith.constant 16 : i32
      %46 = arith.cmpi slt, %45, %c16_i32_21 : i32
      %c128_i32_22 = arith.constant 128 : i32
      %47 = arith.muli %6, %c128_i32_22 : i32
      %c128_i32_23 = arith.constant 128 : i32
      %48 = arith.addi %47, %c128_i32_23 : i32
      %c1_i32_24 = arith.constant 1 : i32
      %49 = arith.subi %48, %c1_i32_24 : i32
      %50 = arith.cmpi slt, %44, %49 : i32
      %51 = arith.andi %46, %50 : i1
      %52 = arith.extui %51 : i1 to i32
      %c0_i32_25 = arith.constant 0 : i32
      %53 = arith.cmpi ne, %52, %c0_i32_25 : i32
      scf.if %53 {
        %54 = arith.index_cast %arg11 : i32 to index
        %c0_26 = arith.constant 0 : index
        %55 = vector.load %arg10[%54, %c0_26] : memref<128x128xf32, #tpu.memory_space<vmem>>, vector<1x128xf32>
        %56 = arith.index_cast %arg11 : i32 to index
        %c0_27 = arith.constant 0 : index
        %57 = vector.load %arg5[%56, %c0_27] : memref<128x1xi32, #tpu.memory_space<vmem>>, vector<1x1xi32>
        %58 = vector.broadcast %44 : i32 to vector<1x128xi32>
        %59 = arith.cmpi sgt, %19, %58 : vector<1x128xi32>
        %60 = arith.andi %59, %21 : vector<1x128xi1>
        %61 = vector.broadcast %57 : vector<1x1xi32> to vector<1x128xi32>
        %62 = arith.cmpi eq, %61, %15 : vector<1x128xi32>
        %63 = arith.andi %60, %62 : vector<1x128xi1>
        %cst_28 = arith.constant 1.000000e+00 : f32
        %cst_29 = arith.constant 0.000000e+00 : f32
        %64 = vector.broadcast %cst_28 : f32 to vector<1x128xf32>
        %65 = vector.broadcast %cst_29 : f32 to vector<1x128xf32>
        %66 = arith.select %63, %64, %65 : vector<1x128xi1>, vector<1x128xf32>
        %cst_30 = arith.constant dense<true> : vector<1x128xi1>
        %67 = arith.xori %62, %cst_30 : vector<1x128xi1>
        %68 = arith.andi %60, %67 : vector<1x128xi1>
        %cst_31 = arith.constant 1.000000e+00 : f32
        %cst_32 = arith.constant 0.000000e+00 : f32
        %69 = vector.broadcast %cst_31 : f32 to vector<1x128xf32>
        %70 = vector.broadcast %cst_32 : f32 to vector<1x128xf32>
        %71 = arith.select %68, %69, %70 : vector<1x128xi1>, vector<1x128xf32>
        %cst_33 = arith.constant 0.999998986 : f32
        %72 = vector.broadcast %cst_33 : f32 to vector<1x128xf32>
        %73 = arith.addf %55, %72 : vector<1x128xf32>
        %cst_34 = arith.constant 4.950000e+01 : f32
        %74 = vector.broadcast %cst_34 : f32 to vector<1x128xf32>
        %75 = arith.mulf %73, %74 : vector<1x128xf32>
        %76 = math.floor %75 : vector<1x128xf32>
        %cst_35 = arith.constant 1.000000e+00 : f32
        %77 = vector.broadcast %cst_35 : f32 to vector<1x128xf32>
        %78 = arith.addf %55, %77 : vector<1x128xf32>
        %cst_36 = arith.constant 4.950000e+01 : f32
        %79 = vector.broadcast %cst_36 : f32 to vector<1x128xf32>
        %80 = arith.mulf %78, %79 : vector<1x128xf32>
        %81 = arith.subf %80, %76 : vector<1x128xf32>
        %82 = arith.fptosi %76 : vector<1x128xf32> to vector<1x128xi32>
        %83 = vector.broadcast %82 : vector<1x128xi32> to vector<104x128xi32>
        %84 = arith.cmpi eq, %22, %83 : vector<104x128xi32>
        %85 = arith.extui %84 : vector<104x128xi1> to vector<104x128xi32>
        %86 = arith.sitofp %85 : vector<104x128xi32> to vector<104x128xf32>
        %87 = arith.truncf %86 : vector<104x128xf32> to vector<104x128xbf16>
        %88 = vector.shape_cast %66 : vector<1x128xf32> to vector<1x128xf32>
        %89 = vector.broadcast %88 : vector<1x128xf32> to vector<6x128xf32>
        %90 = vector.shape_cast %71 : vector<1x128xf32> to vector<1x128xf32>
        %91 = vector.broadcast %90 : vector<1x128xf32> to vector<6x128xf32>
        %92 = arith.select %31, %89, %91 : vector<6x128xi1>, vector<6x128xf32>
        %cst_37 = arith.constant 1.000000e+00 : f32
        %93 = vector.broadcast %cst_37 : f32 to vector<1x128xf32>
        %94 = arith.subf %93, %81 : vector<1x128xf32>
        %95 = vector.shape_cast %81 : vector<1x128xf32> to vector<1x128xf32>
        %96 = vector.broadcast %95 : vector<1x128xf32> to vector<6x128xf32>
        %97 = vector.shape_cast %94 : vector<1x128xf32> to vector<1x128xf32>
        %98 = vector.broadcast %97 : vector<1x128xf32> to vector<6x128xf32>
        %99 = arith.select %36, %96, %98 : vector<6x128xi1>, vector<6x128xf32>
        %cst_38 = arith.constant 1.000000e+00 : f32
        %100 = vector.broadcast %cst_38 : f32 to vector<6x128xf32>
        %101 = arith.select %38, %100, %99 : vector<6x128xi1>, vector<6x128xf32>
        %102 = arith.mulf %92, %101 : vector<6x128xf32>
        %103 = arith.truncf %102 : vector<6x128xf32> to vector<6x128xbf16>
        %c0_39 = arith.constant 0 : index
        %c0_40 = arith.constant 0 : index
        %104 = vector.load %arg9[%c0_39, %c0_40] : memref<104x6xf32, #tpu.memory_space<vmem>>, vector<104x6xf32>
        %cst_41 = arith.constant dense<0.000000e+00> : vector<104x6xf32>
        %105 = tpu.matmul %87, %103, %cst_41 {dimension_numbers = #tpu.dot_dimension_numbers<[1], [1], [0], [0], [0, 0, 1, 0], [], []>} : vector<104x128xbf16>, vector<6x128xbf16>, vector<104x6xf32> -> vector<104x6xf32>
        %106 = arith.addf %104, %105 : vector<104x6xf32>
        %c0_42 = arith.constant 0 : index
        %c0_43 = arith.constant 0 : index
        %107 = vector.load %arg9[%c0_42, %c0_43] : memref<104x6xf32, #tpu.memory_space<vmem>>, vector<104x6xf32>
        tpu.vector_store %arg9[%c0_42, %c0_43], %106 {strides = array<i32>} : memref<104x6xf32, #tpu.memory_space<vmem>>, vector<104x6xf32>,
      } else {
      }
    }
    %c128_i32_17 = arith.constant 128 : i32
    %c0_i32_18 = arith.constant 0 : i32
    %41 = arith.cmpi eq, %arg0, %c0_i32_18 : i32
    %42 = arith.extui %41 : i1 to i32
    %c0_i32_19 = arith.constant 0 : i32
    %43 = arith.cmpi ne, %42, %c0_i32_19 : i32
    scf.if %43 {
      %c0_20 = arith.constant 0 : index
      %c0_21 = arith.constant 0 : index
      %44 = vector.load %arg9[%c0_20, %c0_21] : memref<104x6xf32, #tpu.memory_space<vmem>>, vector<104x6xf32>
      %45 = vector.extract_strided_slice %44 {offsets = [0, 0], sizes = [104, 1], strides = [1, 1]} : vector<104x6xf32> to vector<104x1xf32>
      %46 = vector.extract_strided_slice %44 {offsets = [0, 1], sizes = [104, 1], strides = [1, 1]} : vector<104x6xf32> to vector<104x1xf32>
      %47 = vector.extract_strided_slice %44 {offsets = [0, 2], sizes = [104, 1], strides = [1, 1]} : vector<104x6xf32> to vector<104x1xf32>
      %48 = vector.extract_strided_slice %44 {offsets = [0, 3], sizes = [104, 1], strides = [1, 1]} : vector<104x6xf32> to vector<104x1xf32>
      %49 = vector.extract_strided_slice %44 {offsets = [0, 4], sizes = [104, 1], strides = [1, 1]} : vector<104x6xf32> to vector<104x1xf32>
      %50 = vector.shape_cast %49 : vector<104x1xf32> to vector<1x104x1xf32>
      %cst_22 = arith.constant dense<0.000000e+00> : vector<1xf32>
      %51 = vector.multi_reduction <add>, %50, %cst_22 [1, 2] : vector<1x104x1xf32> to vector<1xf32>
      %52 = vector.shape_cast %51 : vector<1xf32> to vector<1x1x1xf32>
      %53 = vector.extract %52[0, 0, 0] : f32 from vector<1x1x1xf32>
      %54 = vector.broadcast %53 : f32 to vector<1x1xf32>
      %55 = vector.extract_strided_slice %44 {offsets = [0, 5], sizes = [104, 1], strides = [1, 1]} : vector<104x6xf32> to vector<104x1xf32>
      %56 = vector.shape_cast %55 : vector<104x1xf32> to vector<1x104x1xf32>
      %cst_23 = arith.constant dense<0.000000e+00> : vector<1xf32>
      %57 = vector.multi_reduction <add>, %56, %cst_23 [1, 2] : vector<1x104x1xf32> to vector<1xf32>
      %58 = vector.shape_cast %57 : vector<1xf32> to vector<1x1x1xf32>
      %59 = vector.extract %58[0, 0, 0] : f32 from vector<1x1x1xf32>
      %60 = vector.broadcast %59 : f32 to vector<1x1xf32>
      %cst_24 = arith.constant 0.000000e+00 : f32
      %61 = vector.broadcast %cst_24 : f32 to vector<1x1xf32>
      %62 = arith.cmpf ogt, %54, %61 : vector<1x1xf32>
      %cst_25 = arith.constant 1.000000e+00 : f32
      %63 = vector.broadcast %cst_25 : f32 to vector<1x1xf32>
      %64 = arith.divf %63, %54 : vector<1x1xf32>
      %cst_26 = arith.constant 0.000000e+00 : f32
      %65 = vector.broadcast %cst_26 : f32 to vector<1x1xf32>
      %66 = arith.select %62, %64, %65 : vector<1x1xi1>, vector<1x1xf32>
      %cst_27 = arith.constant 0.000000e+00 : f32
      %67 = vector.broadcast %cst_27 : f32 to vector<1x1xf32>
      %68 = arith.cmpf ogt, %60, %67 : vector<1x1xf32>
      %cst_28 = arith.constant 1.000000e+00 : f32
      %69 = vector.broadcast %cst_28 : f32 to vector<1x1xf32>
      %70 = arith.divf %69, %60 : vector<1x1xf32>
      %cst_29 = arith.constant 0.000000e+00 : f32
      %71 = vector.broadcast %cst_29 : f32 to vector<1x1xf32>
      %72 = arith.select %68, %70, %71 : vector<1x1xi1>, vector<1x1xf32>
      %73 = tpu.iota {dimensions = array<i32: 0>} : vector<104x104xi32>
      %74 = tpu.iota {dimensions = array<i32: 1>} : vector<104x104xi32>
      %75 = arith.cmpi sle, %74, %73 : vector<104x104xi32>
      %76 = arith.extui %75 : vector<104x104xi1> to vector<104x104xi32>
      %77 = arith.sitofp %76 : vector<104x104xi32> to vector<104x104xf32>
      %78 = arith.cmpi slt, %74, %73 : vector<104x104xi32>
      %79 = arith.extui %78 : vector<104x104xi1> to vector<104x104xi32>
      %80 = arith.sitofp %79 : vector<104x104xi32> to vector<104x104xf32>
      %c1_i32_30 = arith.constant 1 : i32
      %81 = vector.broadcast %c1_i32_30 : i32 to vector<104x104xi32>
      %82 = arith.subi %73, %81 : vector<104x104xi32>
      %83 = arith.cmpi eq, %74, %82 : vector<104x104xi32>
      %84 = arith.extui %83 : vector<104x104xi1> to vector<104x104xi32>
      %85 = arith.sitofp %84 : vector<104x104xi32> to vector<104x104xf32>
      %cst_31 = arith.constant dense<0.000000e+00> : vector<104x1xf32>
      %86 = tpu.matmul %77, %45, %cst_31 {dimension_numbers = #tpu.dot_dimension_numbers<[1], [0], [0], [1], [0, 0, 1, 1], [], []>} : vector<104x104xf32>, vector<104x1xf32>, vector<104x1xf32> -> vector<104x1xf32>
      %cst_32 = arith.constant dense<0.000000e+00> : vector<104x1xf32>
      %87 = tpu.matmul %80, %46, %cst_32 {dimension_numbers = #tpu.dot_dimension_numbers<[1], [0], [0], [1], [0, 0, 1, 1], [], []>} : vector<104x104xf32>, vector<104x1xf32>, vector<104x1xf32> -> vector<104x1xf32>
      %88 = arith.addf %86, %87 : vector<104x1xf32>
      %89 = vector.broadcast %66 : vector<1x1xf32> to vector<104x1xf32>
      %90 = arith.mulf %88, %89 : vector<104x1xf32>
      %cst_33 = arith.constant dense<0.000000e+00> : vector<104x1xf32>
      %91 = tpu.matmul %85, %48, %cst_33 {dimension_numbers = #tpu.dot_dimension_numbers<[1], [0], [0], [1], [0, 0, 1, 1], [], []>} : vector<104x104xf32>, vector<104x1xf32>, vector<104x1xf32> -> vector<104x1xf32>
      %92 = arith.addf %47, %91 : vector<104x1xf32>
      %93 = vector.broadcast %72 : vector<1x1xf32> to vector<104x1xf32>
      %94 = arith.mulf %92, %93 : vector<104x1xf32>
      %95 = arith.mulf %94, %90 : vector<104x1xf32>
      %96 = vector.shape_cast %95 : vector<104x1xf32> to vector<1x104x1xf32>
      %cst_34 = arith.constant dense<0.000000e+00> : vector<1xf32>
      %97 = vector.multi_reduction <add>, %96, %cst_34 [1, 2] : vector<1x104x1xf32> to vector<1xf32>
      %98 = vector.shape_cast %97 : vector<1xf32> to vector<1x1x1xf32>
      %99 = vector.extract %98[0, 0, 0] : f32 from vector<1x1x1xf32>
      %100 = vector.broadcast %99 : f32 to vector<1x1xf32>
      %c0_35 = arith.constant 0 : index
      %c0_36 = arith.constant 0 : index
      %101 = vector.load %arg7[%c0_35, %c0_36] : memref<1x1xf32, #tpu.memory_space<vmem>>, vector<1x1xf32>
      tpu.vector_store %arg7[%c0_35, %c0_36], %100 {strides = array<i32>} : memref<1x1xf32, #tpu.memory_space<vmem>>, vector<1x1xf32>,
      %102 = arith.addf %54, %60 : vector<1x1xf32>
      %c0_37 = arith.constant 0 : index
      %c0_38 = arith.constant 0 : index
      %103 = vector.load %arg8[%c0_37, %c0_38] : memref<1x1xf32, #tpu.memory_space<vmem>>, vector<1x1xf32>
      tpu.vector_store %arg8[%c0_37, %c0_38], %102 {strides = array<i32>} : memref<1x1xf32, #tpu.memory_space<vmem>>, vector<1x1xf32>,
    } else {
    }
    return
  }
  func.func @transform_0(%arg0: i32, %arg1: memref<1xi32, #tpu.memory_space<smem>>, %arg2: memref<1xi32, #tpu.memory_space<smem>>) -> (i32, i32) {
    %0 = arith.index_cast %arg0 : i32 to index
    %1 = memref.load %arg1[%0] : memref<1xi32, #tpu.memory_space<smem>>
    %c0_i32 = arith.constant 0 : i32
    %c0_i32_0 = arith.constant 0 : i32
    return %1, %c0_i32 : i32, i32
  }
  func.func @transform_1(%arg0: i32, %arg1: memref<1xi32, #tpu.memory_space<smem>>, %arg2: memref<1xi32, #tpu.memory_space<smem>>) -> (i32, i32) {
    %0 = arith.index_cast %arg0 : i32 to index
    %1 = memref.load %arg2[%0] : memref<1xi32, #tpu.memory_space<smem>>
    %c0_i32 = arith.constant 0 : i32
    %c0_i32_0 = arith.constant 0 : i32
    return %1, %c0_i32 : i32, i32
  }
  func.func @transform_2(%arg0: i32, %arg1: memref<1xi32, #tpu.memory_space<smem>>, %arg2: memref<1xi32, #tpu.memory_space<smem>>) -> (i32, i32) {
    %0 = arith.index_cast %arg0 : i32 to index
    %1 = memref.load %arg1[%0] : memref<1xi32, #tpu.memory_space<smem>>
    %c0_i32 = arith.constant 0 : i32
    %c0_i32_0 = arith.constant 0 : i32
    return %1, %c0_i32 : i32, i32
  }
  func.func @transform_3(%arg0: i32, %arg1: memref<1xi32, #tpu.memory_space<smem>>, %arg2: memref<1xi32, #tpu.memory_space<smem>>) -> (i32, i32) {
    %0 = arith.index_cast %arg0 : i32 to index
    %1 = memref.load %arg2[%0] : memref<1xi32, #tpu.memory_space<smem>>
    %c0_i32 = arith.constant 0 : i32
    %c0_i32_0 = arith.constant 0 : i32
    return %c0_i32, %1 : i32, i32
  }
  func.func @transform_4(%arg0: i32, %arg1: memref<1xi32, #tpu.memory_space<smem>>, %arg2: memref<1xi32, #tpu.memory_space<smem>>) -> (i32, i32) {
    %c0_i32 = arith.constant 0 : i32
    %c0_i32_0 = arith.constant 0 : i32
    %c0_i32_1 = arith.constant 0 : i32
    return %c0_i32, %c0_i32_0 : i32, i32
  }
  func.func @transform_5(%arg0: i32, %arg1: memref<1xi32, #tpu.memory_space<smem>>, %arg2: memref<1xi32, #tpu.memory_space<smem>>) -> (i32, i32) {
    %c0_i32 = arith.constant 0 : i32
    %c0_i32_0 = arith.constant 0 : i32
    %c0_i32_1 = arith.constant 0 : i32
    return %c0_i32, %c0_i32_0 : i32, i32
  }
}

</mosaic_0001>

<llo_original>
// kernel: tpu_custom_call.1
$region0: #{tpu_custom_call.1}
  #allocation0 [shape = 'u32[]', space=smem, size = 0x4, offset = 0x4, fixed_abs, tag = 'smem constant byte address 0x4 - core index']
  #allocation1 [shape = 'u32[144,128]{1,0:T(1,128)}', space=vmem, size = 0x12000, scoped, tag = 'internal scratch']
  #allocation2 [shape = 'f32[104,6]{1,0:T(8,128)}', space=vmem, size = 0xd000, scoped, tag = 'scratch operand']
  #allocation3 [shape = 'f32[128,128]{1,0:T(8,128)}', space=vmem, size = 0x10000, scoped, tag = 'scratch operand']
  #allocation4 [shape = 's32[1]{0}', space=sflag, size = 0x4, scoped, tag = 'scoped memory for tpu_custom_call.1']
  #allocation5 [shape = 's32[1]{0:T(128)S(6)}', space=smem, size = 0x200, scoped, tag = 'prefetched SMEM operand 0']
  #allocation6 [shape = 's32[1]{0:T(128)S(6)}', space=smem, size = 0x200, scoped, tag = 'prefetched SMEM operand 1']
  %s0 = inlined_call_operand.<no memory space> [shape: s32[1], index: 0, kind: input, shape index: {}]
  %s1 = inlined_call_operand.<no memory space> [shape: s32[1], index: 1, kind: input, shape index: {}]
  %s2 = inlined_call_operand.vmem [shape: f32[128,32], index: 2, kind: input, shape index: {}]
  %s3 = inlined_call_operand.vmem [shape: f32[128,32], index: 3, kind: input, shape index: {}]
  %s4 = inlined_call_operand.vmem [shape: s32[128,1], index: 4, kind: input, shape index: {}]
  %s5 = inlined_call_operand.vmem [shape: s32[1,128], index: 5, kind: input, shape index: {}]
  %s6 = inlined_call_operand.hbm [shape: f32[1,1], index: 6, kind: output, shape index: {0}]
  %s7 = inlined_call_operand.hbm [shape: f32[1,1], index: 7, kind: output, shape index: {1}]
  %8 = xla_tuple %s6, %s7
  %s9 = sld [smem:[#allocation0]]
  $region53: #{tpu_custom_call.1} parent=0
    _
  %s11 = ssub.s32 1, %s9
  %s12 = scalar_select 0, %s11, %s9
  %13 = sst [smem:[#allocation5]] %s0
  %14 = sst [smem:[#allocation6]] %s1
  $region1: #{tpu_custom_call.1} parent=0
    #allocation7 [shape = 'u8[512]{0}', space=vmem, size = 0x400, scoped, tag = 'output window, operand 0, single buffered']
    #allocation8 [shape = 's32[1]{0}', space=sflag, size = 0x4, scoped, tag = 'scoped memory for tpu_custom_call.1']
    #allocation9 [shape = 'u8[512]{0}', space=vmem, size = 0x400, scoped, tag = 'output window, operand 1, single buffered']
    #allocation10 [shape = 's32[1]{0}', space=sflag, size = 0x4, scoped, tag = 'scoped memory for tpu_custom_call.1']
    %15 = vsyncpa [#allocation8], 0
    %16 = vsyncpa [#allocation10], 0
    // Predicated region
    $region2: #{tpu_custom_call.1} parent=1 // pred_check
      _
    $region3: #{tpu_custom_call.1} parent=1 // pred_check_branch
      %18 = sbr.rel (0) target = $region5
    $region4: #{tpu_custom_call.1} parent=1 // pred_region
      %s19 = sld [smem:[#allocation5]]
      %s20 = smul.u32 16, %s19
      %p21 = scmp.lt.s32.totalorder %s20, 15
      %s22 = scalar_select %p21, %s20, 15
      %s23 = smul.addr %s22, 8
      %s24 = scalar_lea.vmem %s2, %s23
      %s25 = sld [smem:[#allocation5]]
      %s26 = smul.u32 16, %s25
    $region5: #{tpu_custom_call.1} parent=1 // pred_fallthru
      _
    // Predicated region
    $region6: #{tpu_custom_call.1} parent=1 // pred_check
      _
    $region7: #{tpu_custom_call.1} parent=1 // pred_check_branch
      %28 = sbr.rel (0) target = $region9
    $region8: #{tpu_custom_call.1} parent=1 // pred_region
      %s29 = sld [smem:[#allocation6]]
      %s30 = smul.u32 16, %s29
      %p31 = scmp.lt.s32.totalorder %s30, 15
      %s32 = scalar_select %p31, %s30, 15
      %s33 = smul.addr %s32, 8
      %s34 = scalar_lea.vmem %s3, %s33
      %s35 = sld [smem:[#allocation6]]
      %s36 = smul.u32 16, %s35
    $region9: #{tpu_custom_call.1} parent=1 // pred_fallthru
      _
    // Predicated region
    $region10: #{tpu_custom_call.1} parent=1 // pred_check
      _
    $region11: #{tpu_custom_call.1} parent=1 // pred_check_branch
      %38 = sbr.rel (0) target = $region13
    $region12: #{tpu_custom_call.1} parent=1 // pred_region
      %s39 = sld [smem:[#allocation5]]
      %s40 = smul.u32 16, %s39
      %p41 = scmp.lt.s32.totalorder %s40, 15
      %s42 = scalar_select %p41, %s40, 15
      %s43 = smul.addr %s42, 8
      %s44 = scalar_lea.vmem %s4, %s43
      %s45 = sld [smem:[#allocation5]]
      %s46 = smul.u32 16, %s45
    $region13: #{tpu_custom_call.1} parent=1 // pred_fallthru
      _
    // Predicated region
    $region14: #{tpu_custom_call.1} parent=1 // pred_check
      _
    $region15: #{tpu_custom_call.1} parent=1 // pred_check_branch
      %48 = sbr.rel (0) target = $region17
    $region16: #{tpu_custom_call.1} parent=1 // pred_region
      %s49 = sld [smem:[#allocation6]]
      %p50 = scmp.lt.s32.totalorder %s49, 0
      %s51 = scalar_select %p50, %s49, 0
      %s52 = scalar_lea.vmem %s5, %s51
      %s53 = sld [smem:[#allocation6]]
    $region17: #{tpu_custom_call.1} parent=1 // pred_fallthru
      _
    %s54 = sld [smem:[#allocation5]]
    %s55 = smul.u32 16, %s54
    %p56 = scmp.lt.s32.totalorder %s55, 15
    %s57 = scalar_select %p56, %s55, 15
    %s58 = smul.addr %s57, 8
    %s59 = scalar_lea.vmem %s2, %s58
    %s60 = sld [smem:[#allocation6]]
    %s61 = smul.u32 16, %s60
    %p62 = scmp.lt.s32.totalorder %s61, 15
    %s63 = scalar_select %p62, %s61, 15
    %s64 = smul.addr %s63, 8
    %s65 = scalar_lea.vmem %s3, %s64
    %s66 = sld [smem:[#allocation5]]
    %s67 = smul.u32 16, %s66
    %p68 = scmp.lt.s32.totalorder %s67, 15
    %s69 = scalar_select %p68, %s67, 15
    %s70 = smul.addr %s69, 8
    %s71 = scalar_lea.vmem %s4, %s70
    %s72 = sld [smem:[#allocation6]]
    %p73 = scmp.lt.s32.totalorder %s72, 0
    %s74 = scalar_select %p73, %s72, 0
    %s75 = scalar_lea.vmem %s5, %s74
    %s76 = sld [smem:[#allocation5]]
    %s77 = smul.u32 16, %s76
    %p78 = scmp.lt.s32.totalorder %s77, 15
    %s79 = scalar_select %p78, %s77, 15
    %s80 = smul.addr %s79, 8
    %s81 = scalar_lea.vmem %s2, %s80
    %s82 = sld [smem:[#allocation5]]
    %s83 = smul.u32 16, %s82
    %s84 = sld [smem:[#allocation6]]
    %s85 = smul.u32 16, %s84
    %p86 = scmp.lt.s32.totalorder %s85, 15
    %s87 = scalar_select %p86, %s85, 15
    %s88 = smul.addr %s87, 8
    %s89 = scalar_lea.vmem %s3, %s88
    %s90 = sld [smem:[#allocation6]]
    %s91 = smul.u32 16, %s90
    %s92 = sld [smem:[#allocation5]]
    %s93 = smul.u32 16, %s92
    %p94 = scmp.lt.s32.totalorder %s93, 15
    %s95 = scalar_select %p94, %s93, 15
    %s96 = smul.addr %s95, 8
    %s97 = scalar_lea.vmem %s4, %s96
    %s98 = sld [smem:[#allocation5]]
    %s99 = smul.u32 16, %s98
    %s100 = sld [smem:[#allocation6]]
    %p101 = scmp.lt.s32.totalorder %s100, 0
    %s102 = scalar_select %p101, %s100, 0
    %s103 = scalar_lea.vmem %s5, %s102
    %s104 = sld [smem:[#allocation6]]
    %p106 = scmp.eq.s32.totalorder 0, 0
    // Predicated region
    $region18: #{tpu_custom_call.1} parent=1 // pred_check
      %p107 = pneg %p106
    $region19: #{tpu_custom_call.1} parent=1 // pred_check_branch
      %109 = sbr.rel (%p107) target = $region21
    $region20: #{tpu_custom_call.1} parent=1 // pred_region
      %vm110 = vcmask 48128
      %111 = vst.msk [vmem:[#allocation2] sm:$0xff] %vm110, 0.0
      %112 = vst.msk [vmem:[#allocation2 + $0x8] sm:$0xff] %vm110, 0.0
      %113 = vst.msk [vmem:[#allocation2 + $0x10] sm:$0xff] %vm110, 0.0
      %114 = vst.msk [vmem:[#allocation2 + $0x18] sm:$0xff] %vm110, 0.0
      %115 = vst.msk [vmem:[#allocation2 + $0x20] sm:$0xff] %vm110, 0.0
      %116 = vst.msk [vmem:[#allocation2 + $0x28] sm:$0xff] %vm110, 0.0
      %117 = vst.msk [vmem:[#allocation2 + $0x30] sm:$0xff] %vm110, 0.0
      %118 = vst.msk [vmem:[#allocation2 + $0x38] sm:$0xff] %vm110, 0.0
      %119 = vst.msk [vmem:[#allocation2 + $0x40] sm:$0xff] %vm110, 0.0
      %120 = vst.msk [vmem:[#allocation2 + $0x48] sm:$0xff] %vm110, 0.0
      %121 = vst.msk [vmem:[#allocation2 + $0x50] sm:$0xff] %vm110, 0.0
      %122 = vst.msk [vmem:[#allocation2 + $0x58] sm:$0xff] %vm110, 0.0
      %123 = vst.msk [vmem:[#allocation2 + $0x60] sm:$0xff] %vm110, 0.0
    $region21: #{tpu_custom_call.1} parent=1 // pred_fallthru
      _
    %s124 = sld [smem:[#allocation5]]
    %s125 = sld [smem:[#allocation6]]
    %v126 = vld [vmem:[%s81] sm:$0xff]
    %v127 = vld [vmem:[%s81 + $0x8] sm:$0xff]
    %v128 = vld [vmem:[%s81 + $0x10] sm:$0xff]
    %v129 = vld [vmem:[%s81 + $0x18] sm:$0xff]
    %v130 = vld [vmem:[%s81 + $0x20] sm:$0xff]
    %v131 = vld [vmem:[%s81 + $0x28] sm:$0xff]
    %v132 = vld [vmem:[%s81 + $0x30] sm:$0xff]
    %v133 = vld [vmem:[%s81 + $0x38] sm:$0xff]
    %v134 = vld [vmem:[%s81 + $0x40] sm:$0xff]
    %v135 = vld [vmem:[%s81 + $0x48] sm:$0xff]
    %v136 = vld [vmem:[%s81 + $0x50] sm:$0xff]
    %v137 = vld [vmem:[%s81 + $0x58] sm:$0xff]
    %v138 = vld [vmem:[%s81 + $0x60] sm:$0xff]
    %v139 = vld [vmem:[%s81 + $0x68] sm:$0xff]
    %v140 = vld [vmem:[%s81 + $0x70] sm:$0xff]
    %v141 = vld [vmem:[%s81 + $0x78] sm:$0xff]
    %v142 = vld [vmem:[%s89] sm:$0xff]
    %v143 = vld [vmem:[%s89 + $0x8] sm:$0xff]
    %v144 = vld [vmem:[%s89 + $0x10] sm:$0xff]
    %v145 = vld [vmem:[%s89 + $0x18] sm:$0xff]
    %v146 = vld [vmem:[%s89 + $0x20] sm:$0xff]
    %v147 = vld [vmem:[%s89 + $0x28] sm:$0xff]
    %v148 = vld [vmem:[%s89 + $0x30] sm:$0xff]
    %v149 = vld [vmem:[%s89 + $0x38] sm:$0xff]
    %v150 = vld [vmem:[%s89 + $0x40] sm:$0xff]
    %v151 = vld [vmem:[%s89 + $0x48] sm:$0xff]
    %v152 = vld [vmem:[%s89 + $0x50] sm:$0xff]
    %v153 = vld [vmem:[%s89 + $0x58] sm:$0xff]
    %v154 = vld [vmem:[%s89 + $0x60] sm:$0xff]
    %v155 = vld [vmem:[%s89 + $0x68] sm:$0xff]
    %v156 = vld [vmem:[%s89 + $0x70] sm:$0xff]
    %v157 = vld [vmem:[%s89 + $0x78] sm:$0xff]
    %vm158 = vcmask 261120
    %v160 = vsel %vm158, %v126, 0
    %v163 = vsel %vm158, %v127, 0
    %v166 = vsel %vm158, %v128, 0
    %v169 = vsel %vm158, %v129, 0
    %v172 = vsel %vm158, %v130, 0
    %v175 = vsel %vm158, %v131, 0
    %v178 = vsel %vm158, %v132, 0
    %v181 = vsel %vm158, %v133, 0
    %v184 = vsel %vm158, %v134, 0
    %v187 = vsel %vm158, %v135, 0
    %v190 = vsel %vm158, %v136, 0
    %v193 = vsel %vm158, %v137, 0
    %v196 = vsel %vm158, %v138, 0
    %v199 = vsel %vm158, %v139, 0
    %v202 = vsel %vm158, %v140, 0
    %v205 = vsel %vm158, %v141, 0
    %v208 = vsel %vm158, %v142, 0
    %v211 = vsel %vm158, %v143, 0
    %v214 = vsel %vm158, %v144, 0
    %v217 = vsel %vm158, %v145, 0
    %v220 = vsel %vm158, %v146, 0
    %v223 = vsel %vm158, %v147, 0
    %v226 = vsel %vm158, %v148, 0
    %v229 = vsel %vm158, %v149, 0
    %v232 = vsel %vm158, %v150, 0
    %v235 = vsel %vm158, %v151, 0
    %v238 = vsel %vm158, %v152, 0
    %v241 = vsel %vm158, %v153, 0
    %v244 = vsel %vm158, %v154, 0
    %v247 = vsel %vm158, %v155, 0
    %v250 = vsel %vm158, %v156, 0
    %v253 = vsel %vm158, %v157, 0
    %255 = vmatprep.subr.mxu0 0.0
    %256 = vmatpush1.xpose.msra.mxu0 %v253
    %257 = vmatprep.subr.mxu0 0.0
    %258 = vmatpush1.xpose.msra.mxu0 %v250
    %259 = vmatprep.subr.mxu0 0.0
    %260 = vmatpush1.xpose.msra.mxu0 %v247
    %261 = vmatprep.subr.mxu0 0.0
    %262 = vmatpush1.xpose.msra.mxu0 %v244
    %263 = vmatprep.subr.mxu0 0.0
    %264 = vmatpush1.xpose.msra.mxu0 %v241
    %265 = vmatprep.subr.mxu0 0.0
    %266 = vmatpush1.xpose.msra.mxu0 %v238
    %267 = vmatprep.subr.mxu0 0.0
    %268 = vmatpush1.xpose.msra.mxu0 %v235
    %269 = vmatprep.subr.mxu0 0.0
    %270 = vmatpush1.xpose.msra.mxu0 %v232
    %271 = vmatprep.subr.mxu0 0.0
    %272 = vmatpush1.xpose.msra.mxu0 %v229
    %273 = vmatprep.subr.mxu0 0.0
    %274 = vmatpush1.xpose.msra.mxu0 %v226
    %275 = vmatprep.subr.mxu0 0.0
    %276 = vmatpush1.xpose.msra.mxu0 %v223
    %277 = vmatprep.subr.mxu0 0.0
    %278 = vmatpush1.xpose.msra.mxu0 %v220
    %279 = vmatprep.subr.mxu0 0.0
    %280 = vmatpush1.xpose.msra.mxu0 %v217
    %281 = vmatprep.subr.mxu0 0.0
    %282 = vmatpush1.xpose.msra.mxu0 %v214
    %283 = vmatprep.subr.mxu0 0.0
    %284 = vmatpush1.xpose.msra.mxu0 %v211
    %285 = vmatprep.subr.mxu0 0.0
    %286 = vmatpush1.xpose.msra.mxu0 %v208
    %287 = vmatprep.subr.mxu0 0.0
    %288 = vmatpush2.xpose.msra.mxu0 0.0
    %289 = vmatprep.subr.mxu0 0.0
    %290 = vmatpush2.xpose.msra.mxu0 0.0
    %291 = vmatprep.subr.mxu0 0.0
    %292 = vmatpush2.xpose.msra.mxu0 0.0
    %293 = vmatprep.subr.mxu0 0.0
    %294 = vmatpush2.xpose.msra.mxu0 0.0
    %295 = vmatprep.subr.mxu0 0.0
    %296 = vmatpush2.xpose.msra.mxu0 0.0
    %297 = vmatprep.subr.mxu0 0.0
    %298 = vmatpush2.xpose.msra.mxu0 0.0
    %299 = vmatprep.subr.mxu0 0.0
    %300 = vmatpush2.xpose.msra.mxu0 0.0
    %301 = vmatprep.subr.mxu0 0.0
    %302 = vmatpush2.xpose.msra.mxu0 0.0
    %303 = vmatprep.subr.mxu0 0.0
    %304 = vmatpush2.xpose.msra.mxu0 0.0
    %305 = vmatprep.subr.mxu0 0.0
    %306 = vmatpush2.xpose.msra.mxu0 0.0
    %307 = vmatprep.subr.mxu0 0.0
    %308 = vmatpush2.xpose.msra.mxu0 0.0
    %309 = vmatprep.subr.mxu0 0.0
    %310 = vmatpush2.xpose.msra.mxu0 0.0
    %311 = vmatprep.subr.mxu0 0.0
    %312 = vmatpush2.xpose.msra.mxu0 0.0
    %313 = vmatprep.subr.mxu0 0.0
    %314 = vmatpush2.xpose.msra.mxu0 0.0
    %315 = vmatprep.subr.mxu0 0.0
    %316 = vmatpush2.xpose.msra.mxu0 0.0
    %317 = vmatprep.subr.mxu0 0.0
    %318 = vmatpush2.xpose.msra.mxu0 0.0
    %319 = vmatprep.mubr.f32.mxu0 0.0
    %320 = vmatmul.mubr.f32.gmra.mxu0 %v160
    %v321 = vpop.f32.mrf.mxu0
    %v322 = vadd.f32 0.0, %v321
    %v323 = vpop.f32.mrf.mxu0
    %324 = vmatprep.mubr.f32.mxu0 0.0
    %325 = vmatmul.mubr.f32.gmra.mxu0 %v163
    %v326 = vpop.f32.mrf.mxu0
    %v327 = vadd.f32 0.0, %v326
    %v328 = vpop.f32.mrf.mxu0
    %329 = vmatprep.mubr.f32.mxu0 0.0
    %330 = vmatmul.mubr.f32.gmra.mxu0 %v166
    %v331 = vpop.f32.mrf.mxu0
    %v332 = vadd.f32 0.0, %v331
    %v333 = vpop.f32.mrf.mxu0
    %334 = vmatprep.mubr.f32.mxu0 0.0
    %335 = vmatmul.mubr.f32.gmra.mxu0 %v169
    %v336 = vpop.f32.mrf.mxu0
    %v337 = vadd.f32 0.0, %v336
    %v338 = vpop.f32.mrf.mxu0
    %339 = vmatprep.mubr.f32.mxu0 0.0
    %340 = vmatmul.mubr.f32.gmra.mxu0 %v172
    %v341 = vpop.f32.mrf.mxu0
    %v342 = vadd.f32 0.0, %v341
    %v343 = vpop.f32.mrf.mxu0
    %344 = vmatprep.mubr.f32.mxu0 0.0
    %345 = vmatmul.mubr.f32.gmra.mxu0 %v175
    %v346 = vpop.f32.mrf.mxu0
    %v347 = vadd.f32 0.0, %v346
    %v348 = vpop.f32.mrf.mxu0
    %349 = vmatprep.mubr.f32.mxu0 0.0
    %350 = vmatmul.mubr.f32.gmra.mxu0 %v178
    %v351 = vpop.f32.mrf.mxu0
    %v352 = vadd.f32 0.0, %v351
    %v353 = vpop.f32.mrf.mxu0
    %354 = vmatprep.mubr.f32.mxu0 0.0
    %355 = vmatmul.mubr.f32.gmra.mxu0 %v181
    %v356 = vpop.f32.mrf.mxu0
    %v357 = vadd.f32 0.0, %v356
    %v358 = vpop.f32.mrf.mxu0
    %359 = vmatprep.mubr.f32.mxu0 0.0
    %360 = vmatmul.mubr.f32.gmra.mxu0 %v184
    %v361 = vpop.f32.mrf.mxu0
    %v362 = vadd.f32 0.0, %v361
    %v363 = vpop.f32.mrf.mxu0
    %364 = vmatprep.mubr.f32.mxu0 0.0
    %365 = vmatmul.mubr.f32.gmra.mxu0 %v187
    %v366 = vpop.f32.mrf.mxu0
    %v367 = vadd.f32 0.0, %v366
    %v368 = vpop.f32.mrf.mxu0
    %369 = vmatprep.mubr.f32.mxu0 0.0
    %370 = vmatmul.mubr.f32.gmra.mxu0 %v190
    %v371 = vpop.f32.mrf.mxu0
    %v372 = vadd.f32 0.0, %v371
    %v373 = vpop.f32.mrf.mxu0
    %374 = vmatprep.mubr.f32.mxu0 0.0
    %375 = vmatmul.mubr.f32.gmra.mxu0 %v193
    %v376 = vpop.f32.mrf.mxu0
    %v377 = vadd.f32 0.0, %v376
    %v378 = vpop.f32.mrf.mxu0
    %379 = vmatprep.mubr.f32.mxu0 0.0
    %380 = vmatmul.mubr.f32.gmra.mxu0 %v196
    %v381 = vpop.f32.mrf.mxu0
    %v382 = vadd.f32 0.0, %v381
    %v383 = vpop.f32.mrf.mxu0
    %384 = vmatprep.mubr.f32.mxu0 0.0
    %385 = vmatmul.mubr.f32.gmra.mxu0 %v199
    %v386 = vpop.f32.mrf.mxu0
    %v387 = vadd.f32 0.0, %v386
    %v388 = vpop.f32.mrf.mxu0
    %389 = vmatprep.mubr.f32.mxu0 0.0
    %390 = vmatmul.mubr.f32.gmra.mxu0 %v202
    %v391 = vpop.f32.mrf.mxu0
    %v392 = vadd.f32 0.0, %v391
    %v393 = vpop.f32.mrf.mxu0
    %394 = vmatprep.mubr.f32.mxu0 0.0
    %395 = vmatmul.mubr.f32.gmra.mxu0 %v205
    %v396 = vpop.f32.mrf.mxu0
    %v397 = vadd.f32 0.0, %v396
    %v398 = vpop.f32.mrf.mxu0
    %399 = vdwg.mxu0
    %v400 = vmax.f32 %v322, -0.999999
    %v401 = vmax.f32 %v327, -0.999999
    %v402 = vmax.f32 %v332, -0.999999
    %v403 = vmax.f32 %v337, -0.999999
    %v404 = vmax.f32 %v342, -0.999999
    %v405 = vmax.f32 %v347, -0.999999
    %v406 = vmax.f32 %v352, -0.999999
    %v407 = vmax.f32 %v357, -0.999999
    %v408 = vmax.f32 %v362, -0.999999
    %v409 = vmax.f32 %v367, -0.999999
    %v410 = vmax.f32 %v372, -0.999999
    %v411 = vmax.f32 %v377, -0.999999
    %v412 = vmax.f32 %v382, -0.999999
    %v413 = vmax.f32 %v387, -0.999999
    %v414 = vmax.f32 %v392, -0.999999
    %v415 = vmax.f32 %v397, -0.999999
    %v416 = vmin.f32 %v400, 0.999999
    %v417 = vmin.f32 %v401, 0.999999
    %v418 = vmin.f32 %v402, 0.999999
    %v419 = vmin.f32 %v403, 0.999999
    %v420 = vmin.f32 %v404, 0.999999
    %v421 = vmin.f32 %v405, 0.999999
    %v422 = vmin.f32 %v406, 0.999999
    %v423 = vmin.f32 %v407, 0.999999
    %v424 = vmin.f32 %v408, 0.999999
    %v425 = vmin.f32 %v409, 0.999999
    %v426 = vmin.f32 %v410, 0.999999
    %v427 = vmin.f32 %v411, 0.999999
    %v428 = vmin.f32 %v412, 0.999999
    %v429 = vmin.f32 %v413, 0.999999
    %v430 = vmin.f32 %v414, 0.999999
    %v431 = vmin.f32 %v415, 0.999999
    %432 = vst [vmem:[#allocation3] sm:$0xff] %v416
    %433 = vst [vmem:[#allocation3 + $0x8] sm:$0xff] %v417
    %434 = vst [vmem:[#allocation3 + $0x10] sm:$0xff] %v418
    %435 = vst [vmem:[#allocation3 + $0x18] sm:$0xff] %v419
    %436 = vst [vmem:[#allocation3 + $0x20] sm:$0xff] %v420
    %437 = vst [vmem:[#allocation3 + $0x28] sm:$0xff] %v421
    %438 = vst [vmem:[#allocation3 + $0x30] sm:$0xff] %v422
    %439 = vst [vmem:[#allocation3 + $0x38] sm:$0xff] %v423
    %440 = vst [vmem:[#allocation3 + $0x40] sm:$0xff] %v424
    %441 = vst [vmem:[#allocation3 + $0x48] sm:$0xff] %v425
    %442 = vst [vmem:[#allocation3 + $0x50] sm:$0xff] %v426
    %443 = vst [vmem:[#allocation3 + $0x58] sm:$0xff] %v427
    %444 = vst [vmem:[#allocation3 + $0x60] sm:$0xff] %v428
    %445 = vst [vmem:[#allocation3 + $0x68] sm:$0xff] %v429
    %446 = vst [vmem:[#allocation3 + $0x70] sm:$0xff] %v430
    %447 = vst [vmem:[#allocation3 + $0x78] sm:$0xff] %v431
    %v448 = vld [vmem:[%s103] sm:$0x1]
    %s449 = smul.u32 %s125, 128
    %v450 = vlaneseq
    %v451 = vand.u32 %v450, 127
    %v452 = vstv %s449
    %v453 = vadd.s32 %v452, %v451
    %vm454 = vcmp.lt.s32.totalorder %v453, 16
    %v455 = vlaneseq
    %v456 = vshrl.u32 %v455, 7
    %v457 = vadd.s32 %v456, 8
    %v458 = vadd.s32 %v456, 16
    %v459 = vadd.s32 %v456, 24
    %v460 = vadd.s32 %v456, 32
    %v461 = vadd.s32 %v456, 40
    %v462 = vadd.s32 %v456, 48
    %v463 = vadd.s32 %v456, 56
    %v464 = vadd.s32 %v456, 64
    %v465 = vadd.s32 %v456, 72
    %v466 = vadd.s32 %v456, 80
    %v467 = vadd.s32 %v456, 88
    %v468 = vadd.s32 %v456, 96
    %vm469 = vcmp.eq.s32.totalorder %v456, 0
    %vm470 = vcmp.eq.s32.totalorder %v456, 1
    %vm471 = vmor %vm469, %vm470
    %vm472 = vcmp.eq.s32.totalorder %v456, 4
    %vm473 = vmor %vm471, %vm472
    %vm474 = vcmp.eq.s32.totalorder %v456, 3
    %vm475 = vmor %vm470, %vm474
    %vm476 = vcmp.ge.s32.totalorder %v456, 4
    %s477 = smul.u32 %s124, 128
    loop: start=0, step=1, limit=128
    $region22: #{tpu_custom_call.1} parent=1 // loop_pre_header
      _
    $region23: #{tpu_custom_call.1} parent=1 // loop_header
      %s479 = sphi 0, %s483
      %p480 = scmp.ge.s32.totalorder %s479, 128
    $region24: #{tpu_custom_call.1} parent=1 // loop_header_branch
      %482 = sbr.rel (%p480) target = $region28
    $region25: #{tpu_custom_call.1} parent=1 // loop_body
      %s484 = sadd.s32 %s477, %s479
      %s485 = sadd.s32 %s484, 1
      %p486 = scmp.lt.s32.totalorder %s485, 16
      %s487 = sadd.s32 %s449, 127
      %p488 = scmp.lt.s32.totalorder %s484, %s487
      %p489 = pnand %p486, %p488
      %p490 = pneg %p489
      // Predicated region
      $region29: #{tpu_custom_call.1} parent=25 // pred_check
        _
      $region30: #{tpu_custom_call.1} parent=25 // pred_check_branch
        %492 = sbr.rel (%p489) target = $region32
      $region31: #{tpu_custom_call.1} parent=25 // pred_region
        %s493 = scalar_lea.vmem [#allocation3], %s479
        %v494 = vld [vmem:[%s493] sm:$0x1]
        %s495 = scalar_lea.vmem %s97, %s479
        %v496 = vld [vmem:[%s495] sm:$0x1]
        %v497 = vstv %s484
        %vm498 = vcmp.gt.s32.totalorder %v453, %v497
        %vm499 = vmand %vm498, %vm454
        %500 = vset.pattern.permute.xlu0 0
        %501 = vperm.xlu0 %500, %v496
        %v502 = vpop.permute.xlu0 %501
        %vm503 = vcmp.eq.s32.totalorder %v502, %v448
        %vm504 = vmand %vm499, %vm503
        %v505 = vsel %vm504, 1.0, 0.0
        %vm506 = vmxor %vm503, 1
        %vm507 = vmand %vm499, %vm506
        %v508 = vsel %vm507, 1.0, 0.0
        %v509 = vadd.f32 %v494, 0.999999
        %v510 = vmul.f32 %v509, 49.5
        %v511 = vfloor.f32 %v510
        %v512 = vadd.f32 %v494, 1.0
        %v513 = vmul.f32 %v512, 49.5
        %v514 = vsub.f32 %v513, %v511
        %v515 = vcvt.f32.s32.to.zero.pseudo %v511
        %v516 = vlaneseq
        %v517 = vshrl.u32 %v516, 7
        %v518 = vsub.s32 0, %v517
        %v519 = vrot.slane %v515, %v518
        %vm520 = vcmp.eq.s32.totalorder %v456, %v519
        %vm521 = vcmp.eq.s32.totalorder %v457, %v519
        %vm522 = vcmp.eq.s32.totalorder %v458, %v519
        %vm523 = vcmp.eq.s32.totalorder %v459, %v519
        %vm524 = vcmp.eq.s32.totalorder %v460, %v519
        %vm525 = vcmp.eq.s32.totalorder %v461, %v519
        %vm526 = vcmp.eq.s32.totalorder %v462, %v519
        %vm527 = vcmp.eq.s32.totalorder %v463, %v519
        %vm528 = vcmp.eq.s32.totalorder %v464, %v519
        %vm529 = vcmp.eq.s32.totalorder %v465, %v519
        %vm530 = vcmp.eq.s32.totalorder %v466, %v519
        %vm531 = vcmp.eq.s32.totalorder %v467, %v519
        %vm532 = vcmp.eq.s32.totalorder %v468, %v519
        %v533 = vsel %vm520, 1, 0
        %v534 = vsel %vm521, 1, 0
        %v535 = vsel %vm522, 1, 0
        %v536 = vsel %vm523, 1, 0
        %v537 = vsel %vm524, 1, 0
        %v538 = vsel %vm525, 1, 0
        %v539 = vsel %vm526, 1, 0
        %v540 = vsel %vm527, 1, 0
        %v541 = vsel %vm528, 1, 0
        %v542 = vsel %vm529, 1, 0
        %v543 = vsel %vm530, 1, 0
        %v544 = vsel %vm531, 1, 0
        %v545 = vsel %vm532, 1, 0
        %v546 = vcvt.s32.f32 %v533
        %v547 = vcvt.s32.f32 %v534
        %v548 = vcvt.s32.f32 %v535
        %v549 = vcvt.s32.f32 %v536
        %v550 = vcvt.s32.f32 %v537
        %v551 = vcvt.s32.f32 %v538
        %v552 = vcvt.s32.f32 %v539
        %v553 = vcvt.s32.f32 %v540
        %v554 = vcvt.s32.f32 %v541
        %v555 = vcvt.s32.f32 %v542
        %v556 = vcvt.s32.f32 %v543
        %v557 = vcvt.s32.f32 %v544
        %v558 = vcvt.s32.f32 %v545
        %v559 = vpack.c.bf16 %v547, %v546
        %v560 = vpack.c.bf16 %v549, %v548
        %v561 = vpack.c.bf16 %v551, %v550
        %v562 = vpack.c.bf16 %v553, %v552
        %v563 = vpack.c.bf16 %v555, %v554
        %v564 = vpack.c.bf16 %v557, %v556
        %v565 = vpack.c.bf16 %v558, %v558
        %v566 = vlaneseq
        %v567 = vshrl.u32 %v566, 7
        %v568 = vsub.s32 0, %v567
        %v569 = vrot.slane %v505, %v568
        %v570 = vlaneseq
        %v571 = vshrl.u32 %v570, 7
        %v572 = vsub.s32 0, %v571
        %v573 = vrot.slane %v508, %v572
        %v574 = vsel %vm473, %v569, %v573
        %v575 = vsub.f32 1.0, %v514
        %v576 = vlaneseq
        %v577 = vshrl.u32 %v576, 7
        %v578 = vsub.s32 0, %v577
        %v579 = vrot.slane %v514, %v578
        %v580 = vlaneseq
        %v581 = vshrl.u32 %v580, 7
        %v582 = vsub.s32 0, %v581
        %v583 = vrot.slane %v575, %v582
        %v584 = vsel %vm475, %v579, %v583
        %v585 = vsel %vm476, 1.0, %v584
        %v586 = vmul.f32 %v574, %v585
        %v587 = vpack.c.bf16 %v586, %v586
        %v588 = vld [vmem:[#allocation2] sm:$0xff]
        %v589 = vld [vmem:[#allocation2 + $0x8] sm:$0xff]
        %v590 = vld [vmem:[#allocation2 + $0x10] sm:$0xff]
        %v591 = vld [vmem:[#allocation2 + $0x18] sm:$0xff]
        %v592 = vld [vmem:[#allocation2 + $0x20] sm:$0xff]
        %v593 = vld [vmem:[#allocation2 + $0x28] sm:$0xff]
        %v594 = vld [vmem:[#allocation2 + $0x30] sm:$0xff]
        %v595 = vld [vmem:[#allocation2 + $0x38] sm:$0xff]
        %v596 = vld [vmem:[#allocation2 + $0x40] sm:$0xff]
        %v597 = vld [vmem:[#allocation2 + $0x48] sm:$0xff]
        %v598 = vld [vmem:[#allocation2 + $0x50] sm:$0xff]
        %v599 = vld [vmem:[#allocation2 + $0x58] sm:$0xff]
        %v600 = vld [vmem:[#allocation2 + $0x60] sm:$0xff]
        %601 = vmatprep.subr.bf16.mxu0 0
        %602 = vmatpush1.bf16.xpose.msra.mxu0 0
        %603 = vmatprep.subr.bf16.mxu0 0
        %604 = vmatpush1.bf16.xpose.msra.mxu0 0
        %605 = vmatprep.subr.bf16.mxu0 0
        %606 = vmatpush1.bf16.xpose.msra.mxu0 0
        %607 = vmatprep.subr.bf16.mxu0 0
        %608 = vmatpush1.bf16.xpose.msra.mxu0 0
        %609 = vmatprep.subr.bf16.mxu0 0
        %610 = vmatpush1.bf16.xpose.msra.mxu0 0
        %611 = vmatprep.subr.bf16.mxu0 0
        %612 = vmatpush1.bf16.xpose.msra.mxu0 0
        %613 = vmatprep.subr.bf16.mxu0 0
        %614 = vmatpush1.bf16.xpose.msra.mxu0 0
        %615 = vmatprep.subr.bf16.mxu0 0
        %616 = vmatpush1.bf16.xpose.msra.mxu0 %v587
        %617 = vmatprep.subr.bf16.mxu0 0
        %618 = vmatpush2.bf16.xpose.msra.mxu0 0
        %619 = vmatprep.subr.bf16.mxu0 0
        %620 = vmatpush2.bf16.xpose.msra.mxu0 0
        %621 = vmatprep.subr.bf16.mxu0 0
        %622 = vmatpush2.bf16.xpose.msra.mxu0 0
        %623 = vmatprep.subr.bf16.mxu0 0
        %624 = vmatpush2.bf16.xpose.msra.mxu0 0
        %625 = vmatprep.subr.bf16.mxu0 0
        %626 = vmatpush2.bf16.xpose.msra.mxu0 0
        %627 = vmatprep.subr.bf16.mxu0 0
        %628 = vmatpush2.bf16.xpose.msra.mxu0 0
        %629 = vmatprep.subr.bf16.mxu0 0
        %630 = vmatpush2.bf16.xpose.msra.mxu0 0
        %631 = vmatprep.subr.bf16.mxu0 0
        %632 = vmatpush2.bf16.xpose.msra.mxu0 0
        %633 = vmatprep.mubr.bf16.mxu0 0
        %634 = vmatmul.mubr.bf16.gmra.mxu0 %v559
        %v635 = vpop.f32.mrf.mxu0
        %v636 = vadd.f32 0.0, %v635
        %v637 = vpop.f32.mrf.mxu0
        %v638 = vpop.f32.mrf.mxu0
        %v639 = vadd.f32 0.0, %v638
        %v640 = vpop.f32.mrf.mxu0
        %641 = vmatprep.mubr.bf16.mxu0 0
        %642 = vmatmul.mubr.bf16.gmra.mxu0 %v560
        %v643 = vpop.f32.mrf.mxu0
        %v644 = vadd.f32 0.0, %v643
        %v645 = vpop.f32.mrf.mxu0
        %v646 = vpop.f32.mrf.mxu0
        %v647 = vadd.f32 0.0, %v646
        %v648 = vpop.f32.mrf.mxu0
        %649 = vmatprep.mubr.bf16.mxu0 0
        %650 = vmatmul.mubr.bf16.gmra.mxu0 %v561
        %v651 = vpop.f32.mrf.mxu0
        %v652 = vadd.f32 0.0, %v651
        %v653 = vpop.f32.mrf.mxu0
        %v654 = vpop.f32.mrf.mxu0
        %v655 = vadd.f32 0.0, %v654
        %v656 = vpop.f32.mrf.mxu0
        %657 = vmatprep.mubr.bf16.mxu0 0
        %658 = vmatmul.mubr.bf16.gmra.mxu0 %v562
        %v659 = vpop.f32.mrf.mxu0
        %v660 = vadd.f32 0.0, %v659
        %v661 = vpop.f32.mrf.mxu0
        %v662 = vpop.f32.mrf.mxu0
        %v663 = vadd.f32 0.0, %v662
        %v664 = vpop.f32.mrf.mxu0
        %665 = vmatprep.mubr.bf16.mxu0 0
        %666 = vmatmul.mubr.bf16.gmra.mxu0 %v563
        %v667 = vpop.f32.mrf.mxu0
        %v668 = vadd.f32 0.0, %v667
        %v669 = vpop.f32.mrf.mxu0
        %v670 = vpop.f32.mrf.mxu0
        %v671 = vadd.f32 0.0, %v670
        %v672 = vpop.f32.mrf.mxu0
        %673 = vmatprep.mubr.bf16.mxu0 0
        %674 = vmatmul.mubr.bf16.gmra.mxu0 %v564
        %v675 = vpop.f32.mrf.mxu0
        %v676 = vadd.f32 0.0, %v675
        %v677 = vpop.f32.mrf.mxu0
        %v678 = vpop.f32.mrf.mxu0
        %v679 = vadd.f32 0.0, %v678
        %v680 = vpop.f32.mrf.mxu0
        %681 = vmatprep.mubr.bf16.mxu0 0
        %682 = vmatmul.mubr.bf16.gmra.mxu0 %v565
        %v683 = vpop.f32.mrf.mxu0
        %v684 = vadd.f32 0.0, %v683
        %v685 = vpop.f32.mrf.mxu0
        %v686 = vpop.f32.mrf.mxu0
        %v687 = vpop.f32.mrf.mxu0
        %688 = vdwg.mxu0
        %v689 = vadd.f32 %v588, %v636
        %v690 = vadd.f32 %v589, %v639
        %v691 = vadd.f32 %v590, %v644
        %v692 = vadd.f32 %v591, %v647
        %v693 = vadd.f32 %v592, %v652
        %v694 = vadd.f32 %v593, %v655
        %v695 = vadd.f32 %v594, %v660
        %v696 = vadd.f32 %v595, %v663
        %v697 = vadd.f32 %v596, %v668
        %v698 = vadd.f32 %v597, %v671
        %v699 = vadd.f32 %v598, %v676
        %v700 = vadd.f32 %v599, %v679
        %v701 = vadd.f32 %v600, %v684
        %vm702 = vcmask 48128
        %703 = vst.msk [vmem:[#allocation2] sm:$0xff] %vm702, %v689
        %704 = vst.msk [vmem:[#allocation2 + $0x8] sm:$0xff] %vm702, %v690
        %705 = vst.msk [vmem:[#allocation2 + $0x10] sm:$0xff] %vm702, %v691
        %706 = vst.msk [vmem:[#allocation2 + $0x18] sm:$0xff] %vm702, %v692
        %707 = vst.msk [vmem:[#allocation2 + $0x20] sm:$0xff] %vm702, %v693
        %708 = vst.msk [vmem:[#allocation2 + $0x28] sm:$0xff] %vm702, %v694
        %709 = vst.msk [vmem:[#allocation2 + $0x30] sm:$0xff] %vm702, %v695
        %710 = vst.msk [vmem:[#allocation2 + $0x38] sm:$0xff] %vm702, %v696
        %711 = vst.msk [vmem:[#allocation2 + $0x40] sm:$0xff] %vm702, %v697
        %712 = vst.msk [vmem:[#allocation2 + $0x48] sm:$0xff] %vm702, %v698
        %713 = vst.msk [vmem:[#allocation2 + $0x50] sm:$0xff] %vm702, %v699
        %714 = vst.msk [vmem:[#allocation2 + $0x58] sm:$0xff] %vm702, %v700
        %715 = vst.msk [vmem:[#allocation2 + $0x60] sm:$0xff] %vm702, %v701
      $region32: #{tpu_custom_call.1} parent=25 // pred_fallthru
        _
    $region26: #{tpu_custom_call.1} parent=1 // loop_footer
      %s483 = sadd.s32 1, %s479
    $region27: #{tpu_custom_call.1} parent=1 // loop_footer_branch
      %478 = sbr.rel target = $region23
    $region28: #{tpu_custom_call.1} parent=1 // loop_exit
      _
    // Predicated region
    $region33: #{tpu_custom_call.1} parent=1 // pred_check
      %p716 = pneg %p106
    $region34: #{tpu_custom_call.1} parent=1 // pred_check_branch
      %718 = sbr.rel (%p716) target = $region36
    $region35: #{tpu_custom_call.1} parent=1 // pred_region
      %v719 = vld [vmem:[#allocation2] sm:$0xff]
      %v720 = vld [vmem:[#allocation2 + $0x8] sm:$0xff]
      %v721 = vld [vmem:[#allocation2 + $0x10] sm:$0xff]
      %v722 = vld [vmem:[#allocation2 + $0x18] sm:$0xff]
      %v723 = vld [vmem:[#allocation2 + $0x20] sm:$0xff]
      %v724 = vld [vmem:[#allocation2 + $0x28] sm:$0xff]
      %v725 = vld [vmem:[#allocation2 + $0x30] sm:$0xff]
      %v726 = vld [vmem:[#allocation2 + $0x38] sm:$0xff]
      %v727 = vld [vmem:[#allocation2 + $0x40] sm:$0xff]
      %v728 = vld [vmem:[#allocation2 + $0x48] sm:$0xff]
      %v729 = vld [vmem:[#allocation2 + $0x50] sm:$0xff]
      %v730 = vld [vmem:[#allocation2 + $0x58] sm:$0xff]
      %v731 = vld [vmem:[#allocation2 + $0x60] sm:$0xff]
      %745 = vrot.lane.b32.xlu0 %v719, 124
      %v746 = vpop.permute.xlu0 %745
      %747 = vrot.lane.b32.xlu0 %v720, 124
      %v748 = vpop.permute.xlu0 %747
      %749 = vrot.lane.b32.xlu0 %v721, 124
      %v750 = vpop.permute.xlu0 %749
      %751 = vrot.lane.b32.xlu0 %v722, 124
      %v752 = vpop.permute.xlu0 %751
      %753 = vrot.lane.b32.xlu0 %v723, 124
      %v754 = vpop.permute.xlu0 %753
      %755 = vrot.lane.b32.xlu0 %v724, 124
      %v756 = vpop.permute.xlu0 %755
      %757 = vrot.lane.b32.xlu0 %v725, 124
      %v758 = vpop.permute.xlu0 %757
      %759 = vrot.lane.b32.xlu0 %v726, 124
      %v760 = vpop.permute.xlu0 %759
      %761 = vrot.lane.b32.xlu0 %v727, 124
      %v762 = vpop.permute.xlu0 %761
      %763 = vrot.lane.b32.xlu0 %v728, 124
      %v764 = vpop.permute.xlu0 %763
      %765 = vrot.lane.b32.xlu0 %v729, 124
      %v766 = vpop.permute.xlu0 %765
      %767 = vrot.lane.b32.xlu0 %v730, 124
      %v768 = vpop.permute.xlu0 %767
      %769 = vrot.lane.b32.xlu0 %v731, 124
      %v770 = vpop.permute.xlu0 %769
      %vm784 = vcmask 7168
      %v785 = vsel %vm784, %v746, 0.0
      %v786 = vsel %vm784, %v748, 0.0
      %v787 = vadd.f32 %v785, %v786
      %v788 = vsel %vm784, %v750, 0.0
      %v789 = vadd.f32 %v787, %v788
      %v790 = vsel %vm784, %v752, 0.0
      %v791 = vadd.f32 %v789, %v790
      %v792 = vsel %vm784, %v754, 0.0
      %v793 = vadd.f32 %v791, %v792
      %v794 = vsel %vm784, %v756, 0.0
      %v795 = vadd.f32 %v793, %v794
      %v796 = vsel %vm784, %v758, 0.0
      %v797 = vadd.f32 %v795, %v796
      %v798 = vsel %vm784, %v760, 0.0
      %v799 = vadd.f32 %v797, %v798
      %v800 = vsel %vm784, %v762, 0.0
      %v801 = vadd.f32 %v799, %v800
      %v802 = vsel %vm784, %v764, 0.0
      %v803 = vadd.f32 %v801, %v802
      %v804 = vsel %vm784, %v766, 0.0
      %v805 = vadd.f32 %v803, %v804
      %v806 = vsel %vm784, %v768, 0.0
      %v807 = vadd.f32 %v805, %v806
      %v808 = vsel %vm784, %v770, 0.0
      %v809 = vadd.f32 %v807, %v808
      %810 = vadd.xlane.f32.xlu0 %v809
      %v811 = vpop.xlane.xlu0 %810
      %v812 = vrot.slane %v811, 4
      %v813 = vadd.f32 %v811, %v812
      %v814 = vrot.slane %v813, 2
      %v815 = vadd.f32 %v813, %v814
      %v816 = vrot.slane %v815, 1
      %v817 = vadd.f32 %v815, %v816
      %s818 = vtos %v817
      %v819 = vstv %s818
      %820 = vrot.lane.b32.xlu0 %v719, 123
      %v821 = vpop.permute.xlu0 %820
      %822 = vrot.lane.b32.xlu0 %v720, 123
      %v823 = vpop.permute.xlu0 %822
      %824 = vrot.lane.b32.xlu0 %v721, 123
      %v825 = vpop.permute.xlu0 %824
      %826 = vrot.lane.b32.xlu0 %v722, 123
      %v827 = vpop.permute.xlu0 %826
      %828 = vrot.lane.b32.xlu0 %v723, 123
      %v829 = vpop.permute.xlu0 %828
      %830 = vrot.lane.b32.xlu0 %v724, 123
      %v831 = vpop.permute.xlu0 %830
      %832 = vrot.lane.b32.xlu0 %v725, 123
      %v833 = vpop.permute.xlu0 %832
      %834 = vrot.lane.b32.xlu0 %v726, 123
      %v835 = vpop.permute.xlu0 %834
      %836 = vrot.lane.b32.xlu0 %v727, 123
      %v837 = vpop.permute.xlu0 %836
      %838 = vrot.lane.b32.xlu0 %v728, 123
      %v839 = vpop.permute.xlu0 %838
      %840 = vrot.lane.b32.xlu0 %v729, 123
      %v841 = vpop.permute.xlu0 %840
      %842 = vrot.lane.b32.xlu0 %v730, 123
      %v843 = vpop.permute.xlu0 %842
      %844 = vrot.lane.b32.xlu0 %v731, 123
      %v845 = vpop.permute.xlu0 %844
      %v859 = vsel %vm784, %v821, 0.0
      %v860 = vsel %vm784, %v823, 0.0
      %v861 = vadd.f32 %v859, %v860
      %v862 = vsel %vm784, %v825, 0.0
      %v863 = vadd.f32 %v861, %v862
      %v864 = vsel %vm784, %v827, 0.0
      %v865 = vadd.f32 %v863, %v864
      %v866 = vsel %vm784, %v829, 0.0
      %v867 = vadd.f32 %v865, %v866
      %v868 = vsel %vm784, %v831, 0.0
      %v869 = vadd.f32 %v867, %v868
      %v870 = vsel %vm784, %v833, 0.0
      %v871 = vadd.f32 %v869, %v870
      %v872 = vsel %vm784, %v835, 0.0
      %v873 = vadd.f32 %v871, %v872
      %v874 = vsel %vm784, %v837, 0.0
      %v875 = vadd.f32 %v873, %v874
      %v876 = vsel %vm784, %v839, 0.0
      %v877 = vadd.f32 %v875, %v876
      %v878 = vsel %vm784, %v841, 0.0
      %v879 = vadd.f32 %v877, %v878
      %v880 = vsel %vm784, %v843, 0.0
      %v881 = vadd.f32 %v879, %v880
      %v882 = vsel %vm784, %v845, 0.0
      %v883 = vadd.f32 %v881, %v882
      %884 = vadd.xlane.f32.xlu0 %v883
      %v885 = vpop.xlane.xlu0 %884
      %v886 = vrot.slane %v885, 4
      %v887 = vadd.f32 %v885, %v886
      %v888 = vrot.slane %v887, 2
      %v889 = vadd.f32 %v887, %v888
      %v890 = vrot.slane %v889, 1
      %v891 = vadd.f32 %v889, %v890
      %s892 = vtos %v891
      %v893 = vstv %s892
      %vm894 = vcmp.gt.f32.partialorder %v819, 0.0
      %v895 = vrcp.pop %v819
      %v896 = vmul.f32 1.0, %v895
      %v897 = vsel %vm894, %v896, 0.0
      %vm898 = vcmp.gt.f32.partialorder %v893, 0.0
      %v899 = vrcp.pop %v893
      %v900 = vmul.f32 1.0, %v899
      %v901 = vsel %vm898, %v900, 0.0
      %vm902 = vcmp.le.s32.totalorder %v451, %v456
      %vm903 = vcmp.le.s32.totalorder %v451, %v457
      %vm904 = vcmp.le.s32.totalorder %v451, %v458
      %vm905 = vcmp.le.s32.totalorder %v451, %v459
      %vm906 = vcmp.le.s32.totalorder %v451, %v460
      %vm907 = vcmp.le.s32.totalorder %v451, %v461
      %vm908 = vcmp.le.s32.totalorder %v451, %v462
      %vm909 = vcmp.le.s32.totalorder %v451, %v463
      %vm910 = vcmp.le.s32.totalorder %v451, %v464
      %vm911 = vcmp.le.s32.totalorder %v451, %v465
      %vm912 = vcmp.le.s32.totalorder %v451, %v466
      %vm913 = vcmp.le.s32.totalorder %v451, %v467
      %vm914 = vcmp.le.s32.totalorder %v451, %v468
      %v915 = vsel %vm902, 1, 0
      %v916 = vsel %vm903, 1, 0
      %v917 = vsel %vm904, 1, 0
      %v918 = vsel %vm905, 1, 0
      %v919 = vsel %vm906, 1, 0
      %v920 = vsel %vm907, 1, 0
      %v921 = vsel %vm908, 1, 0
      %v922 = vsel %vm909, 1, 0
      %v923 = vsel %vm910, 1, 0
      %v924 = vsel %vm911, 1, 0
      %v925 = vsel %vm912, 1, 0
      %v926 = vsel %vm913, 1, 0
      %v927 = vsel %vm914, 1, 0
      %v928 = vcvt.s32.f32 %v915
      %v929 = vcvt.s32.f32 %v916
      %v930 = vcvt.s32.f32 %v917
      %v931 = vcvt.s32.f32 %v918
      %v932 = vcvt.s32.f32 %v919
      %v933 = vcvt.s32.f32 %v920
      %v934 = vcvt.s32.f32 %v921
      %v935 = vcvt.s32.f32 %v922
      %v936 = vcvt.s32.f32 %v923
      %v937 = vcvt.s32.f32 %v924
      %v938 = vcvt.s32.f32 %v925
      %v939 = vcvt.s32.f32 %v926
      %v940 = vcvt.s32.f32 %v927
      %vm941 = vcmp.lt.s32.totalorder %v451, %v456
      %vm942 = vcmp.lt.s32.totalorder %v451, %v457
      %vm943 = vcmp.lt.s32.totalorder %v451, %v458
      %vm944 = vcmp.lt.s32.totalorder %v451, %v459
      %vm945 = vcmp.lt.s32.totalorder %v451, %v460
      %vm946 = vcmp.lt.s32.totalorder %v451, %v461
      %vm947 = vcmp.lt.s32.totalorder %v451, %v462
      %vm948 = vcmp.lt.s32.totalorder %v451, %v463
      %vm949 = vcmp.lt.s32.totalorder %v451, %v464
      %vm950 = vcmp.lt.s32.totalorder %v451, %v465
      %vm951 = vcmp.lt.s32.totalorder %v451, %v466
      %vm952 = vcmp.lt.s32.totalorder %v451, %v467
      %vm953 = vcmp.lt.s32.totalorder %v451, %v468
      %v954 = vsel %vm941, 1, 0
      %v955 = vsel %vm942, 1, 0
      %v956 = vsel %vm943, 1, 0
      %v957 = vsel %vm944, 1, 0
      %v958 = vsel %vm945, 1, 0
      %v959 = vsel %vm946, 1, 0
      %v960 = vsel %vm947, 1, 0
      %v961 = vsel %vm948, 1, 0
      %v962 = vsel %vm949, 1, 0
      %v963 = vsel %vm950, 1, 0
      %v964 = vsel %vm951, 1, 0
      %v965 = vsel %vm952, 1, 0
      %v966 = vsel %vm953, 1, 0
      %v967 = vcvt.s32.f32 %v954
      %v968 = vcvt.s32.f32 %v955
      %v969 = vcvt.s32.f32 %v956
      %v970 = vcvt.s32.f32 %v957
      %v971 = vcvt.s32.f32 %v958
      %v972 = vcvt.s32.f32 %v959
      %v973 = vcvt.s32.f32 %v960
      %v974 = vcvt.s32.f32 %v961
      %v975 = vcvt.s32.f32 %v962
      %v976 = vcvt.s32.f32 %v963
      %v977 = vcvt.s32.f32 %v964
      %v978 = vcvt.s32.f32 %v965
      %v979 = vcvt.s32.f32 %v966
      %v980 = vsub.s32 %v456, 1
      %v981 = vsub.s32 %v457, 1
      %v982 = vsub.s32 %v458, 1
      %v983 = vsub.s32 %v459, 1
      %v984 = vsub.s32 %v460, 1
      %v985 = vsub.s32 %v461, 1
      %v986 = vsub.s32 %v462, 1
      %v987 = vsub.s32 %v463, 1
      %v988 = vsub.s32 %v464, 1
      %v989 = vsub.s32 %v465, 1
      %v990 = vsub.s32 %v466, 1
      %v991 = vsub.s32 %v467, 1
      %v992 = vsub.s32 %v468, 1
      %vm993 = vcmp.eq.s32.totalorder %v451, %v980
      %vm994 = vcmp.eq.s32.totalorder %v451, %v981
      %vm995 = vcmp.eq.s32.totalorder %v451, %v982
      %vm996 = vcmp.eq.s32.totalorder %v451, %v983
      %vm997 = vcmp.eq.s32.totalorder %v451, %v984
      %vm998 = vcmp.eq.s32.totalorder %v451, %v985
      %vm999 = vcmp.eq.s32.totalorder %v451, %v986
      %vm1000 = vcmp.eq.s32.totalorder %v451, %v987
      %vm1001 = vcmp.eq.s32.totalorder %v451, %v988
      %vm1002 = vcmp.eq.s32.totalorder %v451, %v989
      %vm1003 = vcmp.eq.s32.totalorder %v451, %v990
      %vm1004 = vcmp.eq.s32.totalorder %v451, %v991
      %vm1005 = vcmp.eq.s32.totalorder %v451, %v992
      %v1006 = vsel %vm993, 1, 0
      %v1007 = vsel %vm994, 1, 0
      %v1008 = vsel %vm995, 1, 0
      %v1009 = vsel %vm996, 1, 0
      %v1010 = vsel %vm997, 1, 0
      %v1011 = vsel %vm998, 1, 0
      %v1012 = vsel %vm999, 1, 0
      %v1013 = vsel %vm1000, 1, 0
      %v1014 = vsel %vm1001, 1, 0
      %v1015 = vsel %vm1002, 1, 0
      %v1016 = vsel %vm1003, 1, 0
      %v1017 = vsel %vm1004, 1, 0
      %v1018 = vsel %vm1005, 1, 0
      %v1019 = vcvt.s32.f32 %v1006
      %v1020 = vcvt.s32.f32 %v1007
      %v1021 = vcvt.s32.f32 %v1008
      %v1022 = vcvt.s32.f32 %v1009
      %v1023 = vcvt.s32.f32 %v1010
      %v1024 = vcvt.s32.f32 %v1011
      %v1025 = vcvt.s32.f32 %v1012
      %v1026 = vcvt.s32.f32 %v1013
      %v1027 = vcvt.s32.f32 %v1014
      %v1028 = vcvt.s32.f32 %v1015
      %v1029 = vcvt.s32.f32 %v1016
      %v1030 = vcvt.s32.f32 %v1017
      %v1031 = vcvt.s32.f32 %v1018
      %1032 = vrot.lane.b32.xlu0 %v719, 127
      %v1033 = vpop.permute.xlu0 %1032
      %1034 = vrot.lane.b32.xlu0 %v720, 127
      %v1035 = vpop.permute.xlu0 %1034
      %1036 = vrot.lane.b32.xlu0 %v721, 127
      %v1037 = vpop.permute.xlu0 %1036
      %1038 = vrot.lane.b32.xlu0 %v722, 127
      %v1039 = vpop.permute.xlu0 %1038
      %1040 = vrot.lane.b32.xlu0 %v723, 127
      %v1041 = vpop.permute.xlu0 %1040
      %1042 = vrot.lane.b32.xlu0 %v724, 127
      %v1043 = vpop.permute.xlu0 %1042
      %1044 = vrot.lane.b32.xlu0 %v725, 127
      %v1045 = vpop.permute.xlu0 %1044
      %1046 = vrot.lane.b32.xlu0 %v726, 127
      %v1047 = vpop.permute.xlu0 %1046
      %1048 = vrot.lane.b32.xlu0 %v727, 127
      %v1049 = vpop.permute.xlu0 %1048
      %1050 = vrot.lane.b32.xlu0 %v728, 127
      %v1051 = vpop.permute.xlu0 %1050
      %1052 = vrot.lane.b32.xlu0 %v729, 127
      %v1053 = vpop.permute.xlu0 %1052
      %1054 = vrot.lane.b32.xlu0 %v730, 127
      %v1055 = vpop.permute.xlu0 %1054
      %1056 = vrot.lane.b32.xlu0 %v731, 127
      %v1057 = vpop.permute.xlu0 %1056
      %vm1071 = vcmask 850944
      %v1073 = vsel %vm1071, %v967, 0
      %v1076 = vsel %vm1071, %v968, 0
      %v1079 = vsel %vm1071, %v969, 0
      %v1082 = vsel %vm1071, %v970, 0
      %v1085 = vsel %vm1071, %v971, 0
      %v1088 = vsel %vm1071, %v972, 0
      %v1091 = vsel %vm1071, %v973, 0
      %v1094 = vsel %vm1071, %v974, 0
      %v1097 = vsel %vm1071, %v975, 0
      %v1100 = vsel %vm1071, %v976, 0
      %v1103 = vsel %vm1071, %v977, 0
      %v1106 = vsel %vm1071, %v978, 0
      %v1109 = vsel %vm1071, %v979, 0
      %1111 = vmatprep.subr.mxu0 0.0
      %1112 = vmatpush1.msra.mxu0 0.0
      %1113 = vmatprep.subr.mxu0 0.0
      %1114 = vmatpush1.msra.mxu0 0.0
      %1115 = vmatprep.subr.mxu0 0.0
      %1116 = vmatpush1.msra.mxu0 0.0
      %1117 = vmatprep.subr.mxu0 0.0
      %1118 = vmatpush1.msra.mxu0 %v1057
      %1119 = vmatprep.subr.mxu0 0.0
      %1120 = vmatpush1.msra.mxu0 %v1055
      %1121 = vmatprep.subr.mxu0 0.0
      %1122 = vmatpush1.msra.mxu0 %v1053
      %1123 = vmatprep.subr.mxu0 0.0
      %1124 = vmatpush1.msra.mxu0 %v1051
      %1125 = vmatprep.subr.mxu0 0.0
      %1126 = vmatpush1.msra.mxu0 %v1049
      %1127 = vmatprep.subr.mxu0 0.0
      %1128 = vmatpush1.msra.mxu0 %v1047
      %1129 = vmatprep.subr.mxu0 0.0
      %1130 = vmatpush1.msra.mxu0 %v1045
      %1131 = vmatprep.subr.mxu0 0.0
      %1132 = vmatpush1.msra.mxu0 %v1043
      %1133 = vmatprep.subr.mxu0 0.0
      %1134 = vmatpush1.msra.mxu0 %v1041
      %1135 = vmatprep.subr.mxu0 0.0
      %1136 = vmatpush1.msra.mxu0 %v1039
      %1137 = vmatprep.subr.mxu0 0.0
      %1138 = vmatpush1.msra.mxu0 %v1037
      %1139 = vmatprep.subr.mxu0 0.0
      %1140 = vmatpush1.msra.mxu0 %v1035
      %1141 = vmatprep.subr.mxu0 0.0
      %1142 = vmatpush1.msra.mxu0 %v1033
      %1143 = vmatprep.subr.mxu0 0.0
      %1144 = vmatpush2.msra.mxu0 0.0
      %1145 = vmatprep.subr.mxu0 0.0
      %1146 = vmatpush2.msra.mxu0 0.0
      %1147 = vmatprep.subr.mxu0 0.0
      %1148 = vmatpush2.msra.mxu0 0.0
      %1149 = vmatprep.subr.mxu0 0.0
      %1150 = vmatpush2.msra.mxu0 0.0
      %1151 = vmatprep.subr.mxu0 0.0
      %1152 = vmatpush2.msra.mxu0 0.0
      %1153 = vmatprep.subr.mxu0 0.0
      %1154 = vmatpush2.msra.mxu0 0.0
      %1155 = vmatprep.subr.mxu0 0.0
      %1156 = vmatpush2.msra.mxu0 0.0
      %1157 = vmatprep.subr.mxu0 0.0
      %1158 = vmatpush2.msra.mxu0 0.0
      %1159 = vmatprep.subr.mxu0 0.0
      %1160 = vmatpush2.msra.mxu0 0.0
      %1161 = vmatprep.subr.mxu0 0.0
      %1162 = vmatpush2.msra.mxu0 0.0
      %1163 = vmatprep.subr.mxu0 0.0
      %1164 = vmatpush2.msra.mxu0 0.0
      %1165 = vmatprep.subr.mxu0 0.0
      %1166 = vmatpush2.msra.mxu0 0.0
      %1167 = vmatprep.subr.mxu0 0.0
      %1168 = vmatpush2.msra.mxu0 0.0
      %1169 = vmatprep.subr.mxu0 0.0
      %1170 = vmatpush2.msra.mxu0 0.0
      %1171 = vmatprep.subr.mxu0 0.0
      %1172 = vmatpush2.msra.mxu0 0.0
      %1173 = vmatprep.subr.mxu0 0.0
      %1174 = vmatpush2.msra.mxu0 0.0
      %1175 = vmatprep.mubr.f32.mxu0 0.0
      %1176 = vmatmul.mubr.f32.gmra.mxu0 %v1073
      %v1177 = vpop.f32.mrf.mxu0
      %v1178 = vadd.f32 0.0, %v1177
      %v1179 = vpop.f32.mrf.mxu0
      %1180 = vmatprep.mubr.f32.mxu0 0.0
      %1181 = vmatmul.mubr.f32.gmra.mxu0 %v1076
      %v1182 = vpop.f32.mrf.mxu0
      %v1183 = vadd.f32 0.0, %v1182
      %v1184 = vpop.f32.mrf.mxu0
      %1185 = vmatprep.mubr.f32.mxu0 0.0
      %1186 = vmatmul.mubr.f32.gmra.mxu0 %v1079
      %v1187 = vpop.f32.mrf.mxu0
      %v1188 = vadd.f32 0.0, %v1187
      %v1189 = vpop.f32.mrf.mxu0
      %1190 = vmatprep.mubr.f32.mxu0 0.0
      %1191 = vmatmul.mubr.f32.gmra.mxu0 %v1082
      %v1192 = vpop.f32.mrf.mxu0
      %v1193 = vadd.f32 0.0, %v1192
      %v1194 = vpop.f32.mrf.mxu0
      %1195 = vmatprep.mubr.f32.mxu0 0.0
      %1196 = vmatmul.mubr.f32.gmra.mxu0 %v1085
      %v1197 = vpop.f32.mrf.mxu0
      %v1198 = vadd.f32 0.0, %v1197
      %v1199 = vpop.f32.mrf.mxu0
      %1200 = vmatprep.mubr.f32.mxu0 0.0
      %1201 = vmatmul.mubr.f32.gmra.mxu0 %v1088
      %v1202 = vpop.f32.mrf.mxu0
      %v1203 = vadd.f32 0.0, %v1202
      %v1204 = vpop.f32.mrf.mxu0
      %1205 = vmatprep.mubr.f32.mxu0 0.0
      %1206 = vmatmul.mubr.f32.gmra.mxu0 %v1091
      %v1207 = vpop.f32.mrf.mxu0
      %v1208 = vadd.f32 0.0, %v1207
      %v1209 = vpop.f32.mrf.mxu0
      %1210 = vmatprep.mubr.f32.mxu0 0.0
      %1211 = vmatmul.mubr.f32.gmra.mxu0 %v1094
      %v1212 = vpop.f32.mrf.mxu0
      %v1213 = vadd.f32 0.0, %v1212
      %v1214 = vpop.f32.mrf.mxu0
      %1215 = vmatprep.mubr.f32.mxu0 0.0
      %1216 = vmatmul.mubr.f32.gmra.mxu0 %v1097
      %v1217 = vpop.f32.mrf.mxu0
      %v1218 = vadd.f32 0.0, %v1217
      %v1219 = vpop.f32.mrf.mxu0
      %1220 = vmatprep.mubr.f32.mxu0 0.0
      %1221 = vmatmul.mubr.f32.gmra.mxu0 %v1100
      %v1222 = vpop.f32.mrf.mxu0
      %v1223 = vadd.f32 0.0, %v1222
      %v1224 = vpop.f32.mrf.mxu0
      %1225 = vmatprep.mubr.f32.mxu0 0.0
      %1226 = vmatmul.mubr.f32.gmra.mxu0 %v1103
      %v1227 = vpop.f32.mrf.mxu0
      %v1228 = vadd.f32 0.0, %v1227
      %v1229 = vpop.f32.mrf.mxu0
      %1230 = vmatprep.mubr.f32.mxu0 0.0
      %1231 = vmatmul.mubr.f32.gmra.mxu0 %v1106
      %v1232 = vpop.f32.mrf.mxu0
      %v1233 = vadd.f32 0.0, %v1232
      %v1234 = vpop.f32.mrf.mxu0
      %1235 = vmatprep.mubr.f32.mxu0 0.0
      %1236 = vmatmul.mubr.f32.gmra.mxu0 %v1109
      %v1237 = vpop.f32.mrf.mxu0
      %v1238 = vadd.f32 0.0, %v1237
      %v1239 = vpop.f32.mrf.mxu0
      %1240 = vdwg.mxu0
      %v1242 = vsel %vm1071, %v928, 0
      %v1245 = vsel %vm1071, %v929, 0
      %v1248 = vsel %vm1071, %v930, 0
      %v1251 = vsel %vm1071, %v931, 0
      %v1254 = vsel %vm1071, %v932, 0
      %v1257 = vsel %vm1071, %v933, 0
      %v1260 = vsel %vm1071, %v934, 0
      %v1263 = vsel %vm1071, %v935, 0
      %v1266 = vsel %vm1071, %v936, 0
      %v1269 = vsel %vm1071, %v937, 0
      %v1272 = vsel %vm1071, %v938, 0
      %v1275 = vsel %vm1071, %v939, 0
      %v1278 = vsel %vm1071, %v940, 0
      %1280 = vmatprep.subr.mxu0 0.0
      %1281 = vmatpush1.msra.mxu0 0.0
      %1282 = vmatprep.subr.mxu0 0.0
      %1283 = vmatpush1.msra.mxu0 0.0
      %1284 = vmatprep.subr.mxu0 0.0
      %1285 = vmatpush1.msra.mxu0 0.0
      %1286 = vmatprep.subr.mxu0 0.0
      %1287 = vmatpush1.msra.mxu0 %v731
      %1288 = vmatprep.subr.mxu0 0.0
      %1289 = vmatpush1.msra.mxu0 %v730
      %1290 = vmatprep.subr.mxu0 0.0
      %1291 = vmatpush1.msra.mxu0 %v729
      %1292 = vmatprep.subr.mxu0 0.0
      %1293 = vmatpush1.msra.mxu0 %v728
      %1294 = vmatprep.subr.mxu0 0.0
      %1295 = vmatpush1.msra.mxu0 %v727
      %1296 = vmatprep.subr.mxu0 0.0
      %1297 = vmatpush1.msra.mxu0 %v726
      %1298 = vmatprep.subr.mxu0 0.0
      %1299 = vmatpush1.msra.mxu0 %v725
      %1300 = vmatprep.subr.mxu0 0.0
      %1301 = vmatpush1.msra.mxu0 %v724
      %1302 = vmatprep.subr.mxu0 0.0
      %1303 = vmatpush1.msra.mxu0 %v723
      %1304 = vmatprep.subr.mxu0 0.0
      %1305 = vmatpush1.msra.mxu0 %v722
      %1306 = vmatprep.subr.mxu0 0.0
      %1307 = vmatpush1.msra.mxu0 %v721
      %1308 = vmatprep.subr.mxu0 0.0
      %1309 = vmatpush1.msra.mxu0 %v720
      %1310 = vmatprep.subr.mxu0 0.0
      %1311 = vmatpush1.msra.mxu0 %v719
      %1312 = vmatprep.subr.mxu0 0.0
      %1313 = vmatpush2.msra.mxu0 0.0
      %1314 = vmatprep.subr.mxu0 0.0
      %1315 = vmatpush2.msra.mxu0 0.0
      %1316 = vmatprep.subr.mxu0 0.0
      %1317 = vmatpush2.msra.mxu0 0.0
      %1318 = vmatprep.subr.mxu0 0.0
      %1319 = vmatpush2.msra.mxu0 0.0
      %1320 = vmatprep.subr.mxu0 0.0
      %1321 = vmatpush2.msra.mxu0 0.0
      %1322 = vmatprep.subr.mxu0 0.0
      %1323 = vmatpush2.msra.mxu0 0.0
      %1324 = vmatprep.subr.mxu0 0.0
      %1325 = vmatpush2.msra.mxu0 0.0
      %1326 = vmatprep.subr.mxu0 0.0
      %1327 = vmatpush2.msra.mxu0 0.0
      %1328 = vmatprep.subr.mxu0 0.0
      %1329 = vmatpush2.msra.mxu0 0.0
      %1330 = vmatprep.subr.mxu0 0.0
      %1331 = vmatpush2.msra.mxu0 0.0
      %1332 = vmatprep.subr.mxu0 0.0
      %1333 = vmatpush2.msra.mxu0 0.0
      %1334 = vmatprep.subr.mxu0 0.0
      %1335 = vmatpush2.msra.mxu0 0.0
      %1336 = vmatprep.subr.mxu0 0.0
      %1337 = vmatpush2.msra.mxu0 0.0
      %1338 = vmatprep.subr.mxu0 0.0
      %1339 = vmatpush2.msra.mxu0 0.0
      %1340 = vmatprep.subr.mxu0 0.0
      %1341 = vmatpush2.msra.mxu0 0.0
      %1342 = vmatprep.subr.mxu0 0.0
      %1343 = vmatpush2.msra.mxu0 0.0
      %1344 = vmatprep.mubr.f32.mxu0 0.0
      %1345 = vmatmul.mubr.f32.gmra.mxu0 %v1242
      %v1346 = vpop.f32.mrf.mxu0
      %v1347 = vadd.f32 %v1178, %v1346
      %v1348 = vpop.f32.mrf.mxu0
      %1349 = vmatprep.mubr.f32.mxu0 0.0
      %1350 = vmatmul.mubr.f32.gmra.mxu0 %v1245
      %v1351 = vpop.f32.mrf.mxu0
      %v1352 = vadd.f32 %v1183, %v1351
      %v1353 = vpop.f32.mrf.mxu0
      %1354 = vmatprep.mubr.f32.mxu0 0.0
      %1355 = vmatmul.mubr.f32.gmra.mxu0 %v1248
      %v1356 = vpop.f32.mrf.mxu0
      %v1357 = vadd.f32 %v1188, %v1356
      %v1358 = vpop.f32.mrf.mxu0
      %1359 = vmatprep.mubr.f32.mxu0 0.0
      %1360 = vmatmul.mubr.f32.gmra.mxu0 %v1251
      %v1361 = vpop.f32.mrf.mxu0
      %v1362 = vadd.f32 %v1193, %v1361
      %v1363 = vpop.f32.mrf.mxu0
      %1364 = vmatprep.mubr.f32.mxu0 0.0
      %1365 = vmatmul.mubr.f32.gmra.mxu0 %v1254
      %v1366 = vpop.f32.mrf.mxu0
      %v1367 = vadd.f32 %v1198, %v1366
      %v1368 = vpop.f32.mrf.mxu0
      %1369 = vmatprep.mubr.f32.mxu0 0.0
      %1370 = vmatmul.mubr.f32.gmra.mxu0 %v1257
      %v1371 = vpop.f32.mrf.mxu0
      %v1372 = vadd.f32 %v1203, %v1371
      %v1373 = vpop.f32.mrf.mxu0
      %1374 = vmatprep.mubr.f32.mxu0 0.0
      %1375 = vmatmul.mubr.f32.gmra.mxu0 %v1260
      %v1376 = vpop.f32.mrf.mxu0
      %v1377 = vadd.f32 %v1208, %v1376
      %v1378 = vpop.f32.mrf.mxu0
      %1379 = vmatprep.mubr.f32.mxu0 0.0
      %1380 = vmatmul.mubr.f32.gmra.mxu0 %v1263
      %v1381 = vpop.f32.mrf.mxu0
      %v1382 = vadd.f32 %v1213, %v1381
      %v1383 = vpop.f32.mrf.mxu0
      %1384 = vmatprep.mubr.f32.mxu0 0.0
      %1385 = vmatmul.mubr.f32.gmra.mxu0 %v1266
      %v1386 = vpop.f32.mrf.mxu0
      %v1387 = vadd.f32 %v1218, %v1386
      %v1388 = vpop.f32.mrf.mxu0
      %1389 = vmatprep.mubr.f32.mxu0 0.0
      %1390 = vmatmul.mubr.f32.gmra.mxu0 %v1269
      %v1391 = vpop.f32.mrf.mxu0
      %v1392 = vadd.f32 %v1223, %v1391
      %v1393 = vpop.f32.mrf.mxu0
      %1394 = vmatprep.mubr.f32.mxu0 0.0
      %1395 = vmatmul.mubr.f32.gmra.mxu0 %v1272
      %v1396 = vpop.f32.mrf.mxu0
      %v1397 = vadd.f32 %v1228, %v1396
      %v1398 = vpop.f32.mrf.mxu0
      %1399 = vmatprep.mubr.f32.mxu0 0.0
      %1400 = vmatmul.mubr.f32.gmra.mxu0 %v1275
      %v1401 = vpop.f32.mrf.mxu0
      %v1402 = vadd.f32 %v1233, %v1401
      %v1403 = vpop.f32.mrf.mxu0
      %1404 = vmatprep.mubr.f32.mxu0 0.0
      %1405 = vmatmul.mubr.f32.gmra.mxu0 %v1278
      %v1406 = vpop.f32.mrf.mxu0
      %v1407 = vadd.f32 %v1238, %v1406
      %v1408 = vpop.f32.mrf.mxu0
      %1409 = vdwg.mxu0
      %v1410 = vmul.f32 %v1347, %v897
      %v1411 = vmul.f32 %v1352, %v897
      %v1412 = vmul.f32 %v1357, %v897
      %v1413 = vmul.f32 %v1362, %v897
      %v1414 = vmul.f32 %v1367, %v897
      %v1415 = vmul.f32 %v1372, %v897
      %v1416 = vmul.f32 %v1377, %v897
      %v1417 = vmul.f32 %v1382, %v897
      %v1418 = vmul.f32 %v1387, %v897
      %v1419 = vmul.f32 %v1392, %v897
      %v1420 = vmul.f32 %v1397, %v897
      %v1421 = vmul.f32 %v1402, %v897
      %v1422 = vmul.f32 %v1407, %v897
      %1423 = vrot.lane.b32.xlu0 %v719, 125
      %v1424 = vpop.permute.xlu0 %1423
      %1425 = vrot.lane.b32.xlu0 %v720, 125
      %v1426 = vpop.permute.xlu0 %1425
      %1427 = vrot.lane.b32.xlu0 %v721, 125
      %v1428 = vpop.permute.xlu0 %1427
      %1429 = vrot.lane.b32.xlu0 %v722, 125
      %v1430 = vpop.permute.xlu0 %1429
      %1431 = vrot.lane.b32.xlu0 %v723, 125
      %v1432 = vpop.permute.xlu0 %1431
      %1433 = vrot.lane.b32.xlu0 %v724, 125
      %v1434 = vpop.permute.xlu0 %1433
      %1435 = vrot.lane.b32.xlu0 %v725, 125
      %v1436 = vpop.permute.xlu0 %1435
      %1437 = vrot.lane.b32.xlu0 %v726, 125
      %v1438 = vpop.permute.xlu0 %1437
      %1439 = vrot.lane.b32.xlu0 %v727, 125
      %v1440 = vpop.permute.xlu0 %1439
      %1441 = vrot.lane.b32.xlu0 %v728, 125
      %v1442 = vpop.permute.xlu0 %1441
      %1443 = vrot.lane.b32.xlu0 %v729, 125
      %v1444 = vpop.permute.xlu0 %1443
      %1445 = vrot.lane.b32.xlu0 %v730, 125
      %v1446 = vpop.permute.xlu0 %1445
      %1447 = vrot.lane.b32.xlu0 %v731, 125
      %v1448 = vpop.permute.xlu0 %1447
      %v1463 = vsel %vm1071, %v1019, 0
      %v1466 = vsel %vm1071, %v1020, 0
      %v1469 = vsel %vm1071, %v1021, 0
      %v1472 = vsel %vm1071, %v1022, 0
      %v1475 = vsel %vm1071, %v1023, 0
      %v1478 = vsel %vm1071, %v1024, 0
      %v1481 = vsel %vm1071, %v1025, 0
      %v1484 = vsel %vm1071, %v1026, 0
      %v1487 = vsel %vm1071, %v1027, 0
      %v1490 = vsel %vm1071, %v1028, 0
      %v1493 = vsel %vm1071, %v1029, 0
      %v1496 = vsel %vm1071, %v1030, 0
      %v1499 = vsel %vm1071, %v1031, 0
      %1501 = vmatprep.subr.mxu0 0.0
      %1502 = vmatpush1.msra.mxu0 0.0
      %1503 = vmatprep.subr.mxu0 0.0
      %1504 = vmatpush1.msra.mxu0 0.0
      %1505 = vmatprep.subr.mxu0 0.0
      %1506 = vmatpush1.msra.mxu0 0.0
      %1507 = vmatprep.subr.mxu0 0.0
      %1508 = vmatpush1.msra.mxu0 %v1448
      %1509 = vmatprep.subr.mxu0 0.0
      %1510 = vmatpush1.msra.mxu0 %v1446
      %1511 = vmatprep.subr.mxu0 0.0
      %1512 = vmatpush1.msra.mxu0 %v1444
      %1513 = vmatprep.subr.mxu0 0.0
      %1514 = vmatpush1.msra.mxu0 %v1442
      %1515 = vmatprep.subr.mxu0 0.0
      %1516 = vmatpush1.msra.mxu0 %v1440
      %1517 = vmatprep.subr.mxu0 0.0
      %1518 = vmatpush1.msra.mxu0 %v1438
      %1519 = vmatprep.subr.mxu0 0.0
      %1520 = vmatpush1.msra.mxu0 %v1436
      %1521 = vmatprep.subr.mxu0 0.0
      %1522 = vmatpush1.msra.mxu0 %v1434
      %1523 = vmatprep.subr.mxu0 0.0
      %1524 = vmatpush1.msra.mxu0 %v1432
      %1525 = vmatprep.subr.mxu0 0.0
      %1526 = vmatpush1.msra.mxu0 %v1430
      %1527 = vmatprep.subr.mxu0 0.0
      %1528 = vmatpush1.msra.mxu0 %v1428
      %1529 = vmatprep.subr.mxu0 0.0
      %1530 = vmatpush1.msra.mxu0 %v1426
      %1531 = vmatprep.subr.mxu0 0.0
      %1532 = vmatpush1.msra.mxu0 %v1424
      %1533 = vmatprep.subr.mxu0 0.0
      %1534 = vmatpush2.msra.mxu0 0.0
      %1535 = vmatprep.subr.mxu0 0.0
      %1536 = vmatpush2.msra.mxu0 0.0
      %1537 = vmatprep.subr.mxu0 0.0
      %1538 = vmatpush2.msra.mxu0 0.0
      %1539 = vmatprep.subr.mxu0 0.0
      %1540 = vmatpush2.msra.mxu0 0.0
      %1541 = vmatprep.subr.mxu0 0.0
      %1542 = vmatpush2.msra.mxu0 0.0
      %1543 = vmatprep.subr.mxu0 0.0
      %1544 = vmatpush2.msra.mxu0 0.0
      %1545 = vmatprep.subr.mxu0 0.0
      %1546 = vmatpush2.msra.mxu0 0.0
      %1547 = vmatprep.subr.mxu0 0.0
      %1548 = vmatpush2.msra.mxu0 0.0
      %1549 = vmatprep.subr.mxu0 0.0
      %1550 = vmatpush2.msra.mxu0 0.0
      %1551 = vmatprep.subr.mxu0 0.0
      %1552 = vmatpush2.msra.mxu0 0.0
      %1553 = vmatprep.subr.mxu0 0.0
      %1554 = vmatpush2.msra.mxu0 0.0
      %1555 = vmatprep.subr.mxu0 0.0
      %1556 = vmatpush2.msra.mxu0 0.0
      %1557 = vmatprep.subr.mxu0 0.0
      %1558 = vmatpush2.msra.mxu0 0.0
      %1559 = vmatprep.subr.mxu0 0.0
      %1560 = vmatpush2.msra.mxu0 0.0
      %1561 = vmatprep.subr.mxu0 0.0
      %1562 = vmatpush2.msra.mxu0 0.0
      %1563 = vmatprep.subr.mxu0 0.0
      %1564 = vmatpush2.msra.mxu0 0.0
      %1565 = vmatprep.mubr.f32.mxu0 0.0
      %1566 = vmatmul.mubr.f32.gmra.mxu0 %v1463
      %v1567 = vpop.f32.mrf.mxu0
      %v1568 = vadd.f32 0.0, %v1567
      %v1569 = vpop.f32.mrf.mxu0
      %1570 = vmatprep.mubr.f32.mxu0 0.0
      %1571 = vmatmul.mubr.f32.gmra.mxu0 %v1466
      %v1572 = vpop.f32.mrf.mxu0
      %v1573 = vadd.f32 0.0, %v1572
      %v1574 = vpop.f32.mrf.mxu0
      %1575 = vmatprep.mubr.f32.mxu0 0.0
      %1576 = vmatmul.mubr.f32.gmra.mxu0 %v1469
      %v1577 = vpop.f32.mrf.mxu0
      %v1578 = vadd.f32 0.0, %v1577
      %v1579 = vpop.f32.mrf.mxu0
      %1580 = vmatprep.mubr.f32.mxu0 0.0
      %1581 = vmatmul.mubr.f32.gmra.mxu0 %v1472
      %v1582 = vpop.f32.mrf.mxu0
      %v1583 = vadd.f32 0.0, %v1582
      %v1584 = vpop.f32.mrf.mxu0
      %1585 = vmatprep.mubr.f32.mxu0 0.0
      %1586 = vmatmul.mubr.f32.gmra.mxu0 %v1475
      %v1587 = vpop.f32.mrf.mxu0
      %v1588 = vadd.f32 0.0, %v1587
      %v1589 = vpop.f32.mrf.mxu0
      %1590 = vmatprep.mubr.f32.mxu0 0.0
      %1591 = vmatmul.mubr.f32.gmra.mxu0 %v1478
      %v1592 = vpop.f32.mrf.mxu0
      %v1593 = vadd.f32 0.0, %v1592
      %v1594 = vpop.f32.mrf.mxu0
      %1595 = vmatprep.mubr.f32.mxu0 0.0
      %1596 = vmatmul.mubr.f32.gmra.mxu0 %v1481
      %v1597 = vpop.f32.mrf.mxu0
      %v1598 = vadd.f32 0.0, %v1597
      %v1599 = vpop.f32.mrf.mxu0
      %1600 = vmatprep.mubr.f32.mxu0 0.0
      %1601 = vmatmul.mubr.f32.gmra.mxu0 %v1484
      %v1602 = vpop.f32.mrf.mxu0
      %v1603 = vadd.f32 0.0, %v1602
      %v1604 = vpop.f32.mrf.mxu0
      %1605 = vmatprep.mubr.f32.mxu0 0.0
      %1606 = vmatmul.mubr.f32.gmra.mxu0 %v1487
      %v1607 = vpop.f32.mrf.mxu0
      %v1608 = vadd.f32 0.0, %v1607
      %v1609 = vpop.f32.mrf.mxu0
      %1610 = vmatprep.mubr.f32.mxu0 0.0
      %1611 = vmatmul.mubr.f32.gmra.mxu0 %v1490
      %v1612 = vpop.f32.mrf.mxu0
      %v1613 = vadd.f32 0.0, %v1612
      %v1614 = vpop.f32.mrf.mxu0
      %1615 = vmatprep.mubr.f32.mxu0 0.0
      %1616 = vmatmul.mubr.f32.gmra.mxu0 %v1493
      %v1617 = vpop.f32.mrf.mxu0
      %v1618 = vadd.f32 0.0, %v1617
      %v1619 = vpop.f32.mrf.mxu0
      %1620 = vmatprep.mubr.f32.mxu0 0.0
      %1621 = vmatmul.mubr.f32.gmra.mxu0 %v1496
      %v1622 = vpop.f32.mrf.mxu0
      %v1623 = vadd.f32 0.0, %v1622
      %v1624 = vpop.f32.mrf.mxu0
      %1625 = vmatprep.mubr.f32.mxu0 0.0
      %1626 = vmatmul.mubr.f32.gmra.mxu0 %v1499
      %v1627 = vpop.f32.mrf.mxu0
      %v1628 = vadd.f32 0.0, %v1627
      %v1629 = vpop.f32.mrf.mxu0
      %1630 = vdwg.mxu0
      %1644 = vrot.lane.b32.xlu0 %v1568, 2
      %v1645 = vpop.permute.xlu0 %1644
      %1646 = vrot.lane.b32.xlu0 %v1573, 2
      %v1647 = vpop.permute.xlu0 %1646
      %1648 = vrot.lane.b32.xlu0 %v1578, 2
      %v1649 = vpop.permute.xlu0 %1648
      %1650 = vrot.lane.b32.xlu0 %v1583, 2
      %v1651 = vpop.permute.xlu0 %1650
      %1652 = vrot.lane.b32.xlu0 %v1588, 2
      %v1653 = vpop.permute.xlu0 %1652
      %1654 = vrot.lane.b32.xlu0 %v1593, 2
      %v1655 = vpop.permute.xlu0 %1654
      %1656 = vrot.lane.b32.xlu0 %v1598, 2
      %v1657 = vpop.permute.xlu0 %1656
      %1658 = vrot.lane.b32.xlu0 %v1603, 2
      %v1659 = vpop.permute.xlu0 %1658
      %1660 = vrot.lane.b32.xlu0 %v1608, 2
      %v1661 = vpop.permute.xlu0 %1660
      %1662 = vrot.lane.b32.xlu0 %v1613, 2
      %v1663 = vpop.permute.xlu0 %1662
      %1664 = vrot.lane.b32.xlu0 %v1618, 2
      %v1665 = vpop.permute.xlu0 %1664
      %1666 = vrot.lane.b32.xlu0 %v1623, 2
      %v1667 = vpop.permute.xlu0 %1666
      %1668 = vrot.lane.b32.xlu0 %v1628, 2
      %v1669 = vpop.permute.xlu0 %1668
      %v1683 = vadd.f32 %v719, %v1645
      %v1684 = vadd.f32 %v720, %v1647
      %v1685 = vadd.f32 %v721, %v1649
      %v1686 = vadd.f32 %v722, %v1651
      %v1687 = vadd.f32 %v723, %v1653
      %v1688 = vadd.f32 %v724, %v1655
      %v1689 = vadd.f32 %v725, %v1657
      %v1690 = vadd.f32 %v726, %v1659
      %v1691 = vadd.f32 %v727, %v1661
      %v1692 = vadd.f32 %v728, %v1663
      %v1693 = vadd.f32 %v729, %v1665
      %v1694 = vadd.f32 %v730, %v1667
      %v1695 = vadd.f32 %v731, %v1669
      %v1696 = vmul.f32 %v1683, %v901
      %v1697 = vmul.f32 %v1684, %v901
      %v1698 = vmul.f32 %v1685, %v901
      %v1699 = vmul.f32 %v1686, %v901
      %v1700 = vmul.f32 %v1687, %v901
      %v1701 = vmul.f32 %v1688, %v901
      %v1702 = vmul.f32 %v1689, %v901
      %v1703 = vmul.f32 %v1690, %v901
      %v1704 = vmul.f32 %v1691, %v901
      %v1705 = vmul.f32 %v1692, %v901
      %v1706 = vmul.f32 %v1693, %v901
      %v1707 = vmul.f32 %v1694, %v901
      %v1708 = vmul.f32 %v1695, %v901
      %1722 = vrot.lane.b32.xlu0 %v1410, 2
      %v1723 = vpop.permute.xlu0 %1722
      %1724 = vrot.lane.b32.xlu0 %v1411, 2
      %v1725 = vpop.permute.xlu0 %1724
      %1726 = vrot.lane.b32.xlu0 %v1412, 2
      %v1727 = vpop.permute.xlu0 %1726
      %1728 = vrot.lane.b32.xlu0 %v1413, 2
      %v1729 = vpop.permute.xlu0 %1728
      %1730 = vrot.lane.b32.xlu0 %v1414, 2
      %v1731 = vpop.permute.xlu0 %1730
      %1732 = vrot.lane.b32.xlu0 %v1415, 2
      %v1733 = vpop.permute.xlu0 %1732
      %1734 = vrot.lane.b32.xlu0 %v1416, 2
      %v1735 = vpop.permute.xlu0 %1734
      %1736 = vrot.lane.b32.xlu0 %v1417, 2
      %v1737 = vpop.permute.xlu0 %1736
      %1738 = vrot.lane.b32.xlu0 %v1418, 2
      %v1739 = vpop.permute.xlu0 %1738
      %1740 = vrot.lane.b32.xlu0 %v1419, 2
      %v1741 = vpop.permute.xlu0 %1740
      %1742 = vrot.lane.b32.xlu0 %v1420, 2
      %v1743 = vpop.permute.xlu0 %1742
      %1744 = vrot.lane.b32.xlu0 %v1421, 2
      %v1745 = vpop.permute.xlu0 %1744
      %1746 = vrot.lane.b32.xlu0 %v1422, 2
      %v1747 = vpop.permute.xlu0 %1746
      %v1761 = vmul.f32 %v1696, %v1723
      %v1762 = vmul.f32 %v1697, %v1725
      %v1763 = vmul.f32 %v1698, %v1727
      %v1764 = vmul.f32 %v1699, %v1729
      %v1765 = vmul.f32 %v1700, %v1731
      %v1766 = vmul.f32 %v1701, %v1733
      %v1767 = vmul.f32 %v1702, %v1735
      %v1768 = vmul.f32 %v1703, %v1737
      %v1769 = vmul.f32 %v1704, %v1739
      %v1770 = vmul.f32 %v1705, %v1741
      %v1771 = vmul.f32 %v1706, %v1743
      %v1772 = vmul.f32 %v1707, %v1745
      %v1773 = vmul.f32 %v1708, %v1747
      %1787 = vrot.lane.b32.xlu0 %v1761, 126
      %v1788 = vpop.permute.xlu0 %1787
      %1789 = vrot.lane.b32.xlu0 %v1762, 126
      %v1790 = vpop.permute.xlu0 %1789
      %1791 = vrot.lane.b32.xlu0 %v1763, 126
      %v1792 = vpop.permute.xlu0 %1791
      %1793 = vrot.lane.b32.xlu0 %v1764, 126
      %v1794 = vpop.permute.xlu0 %1793
      %1795 = vrot.lane.b32.xlu0 %v1765, 126
      %v1796 = vpop.permute.xlu0 %1795
      %1797 = vrot.lane.b32.xlu0 %v1766, 126
      %v1798 = vpop.permute.xlu0 %1797
      %1799 = vrot.lane.b32.xlu0 %v1767, 126
      %v1800 = vpop.permute.xlu0 %1799
      %1801 = vrot.lane.b32.xlu0 %v1768, 126
      %v1802 = vpop.permute.xlu0 %1801
      %1803 = vrot.lane.b32.xlu0 %v1769, 126
      %v1804 = vpop.permute.xlu0 %1803
      %1805 = vrot.lane.b32.xlu0 %v1770, 126
      %v1806 = vpop.permute.xlu0 %1805
      %1807 = vrot.lane.b32.xlu0 %v1771, 126
      %v1808 = vpop.permute.xlu0 %1807
      %1809 = vrot.lane.b32.xlu0 %v1772, 126
      %v1810 = vpop.permute.xlu0 %1809
      %1811 = vrot.lane.b32.xlu0 %v1773, 126
      %v1812 = vpop.permute.xlu0 %1811
      %v1826 = vsel %vm784, %v1788, 0.0
      %v1827 = vsel %vm784, %v1790, 0.0
      %v1828 = vadd.f32 %v1826, %v1827
      %v1829 = vsel %vm784, %v1792, 0.0
      %v1830 = vadd.f32 %v1828, %v1829
      %v1831 = vsel %vm784, %v1794, 0.0
      %v1832 = vadd.f32 %v1830, %v1831
      %v1833 = vsel %vm784, %v1796, 0.0
      %v1834 = vadd.f32 %v1832, %v1833
      %v1835 = vsel %vm784, %v1798, 0.0
      %v1836 = vadd.f32 %v1834, %v1835
      %v1837 = vsel %vm784, %v1800, 0.0
      %v1838 = vadd.f32 %v1836, %v1837
      %v1839 = vsel %vm784, %v1802, 0.0
      %v1840 = vadd.f32 %v1838, %v1839
      %v1841 = vsel %vm784, %v1804, 0.0
      %v1842 = vadd.f32 %v1840, %v1841
      %v1843 = vsel %vm784, %v1806, 0.0
      %v1844 = vadd.f32 %v1842, %v1843
      %v1845 = vsel %vm784, %v1808, 0.0
      %v1846 = vadd.f32 %v1844, %v1845
      %v1847 = vsel %vm784, %v1810, 0.0
      %v1848 = vadd.f32 %v1846, %v1847
      %v1849 = vsel %vm784, %v1812, 0.0
      %v1850 = vadd.f32 %v1848, %v1849
      %1851 = vadd.xlane.f32.xlu0 %v1850
      %v1852 = vpop.xlane.xlu0 %1851
      %v1853 = vrot.slane %v1852, 4
      %v1854 = vadd.f32 %v1852, %v1853
      %v1855 = vrot.slane %v1854, 2
      %v1856 = vadd.f32 %v1854, %v1855
      %v1857 = vrot.slane %v1856, 1
      %v1858 = vadd.f32 %v1856, %v1857
      %s1859 = vtos %v1858
      %v1860 = vstv %s1859
      %vm1861 = vcmask 0
      %1862 = vst.msk [vmem:[#allocation7] sm:$0x1] %vm1861, %v1860
      %v1863 = vadd.f32 %v819, %v893
      %1864 = vst.msk [vmem:[#allocation9] sm:$0x1] %vm1861, %v1863
    $region36: #{tpu_custom_call.1} parent=1 // pred_fallthru
      _
    // Predicated region
    $region37: #{tpu_custom_call.1} parent=1 // pred_check
      _
    $region38: #{tpu_custom_call.1} parent=1 // pred_check_branch
      %1866 = sbr.rel (0) target = $region40
    $region39: #{tpu_custom_call.1} parent=1 // pred_region
      %s1868 = ssub.s32 16, 16
      %1869 = vsyncadd [#allocation8], %s1868
      %s1871 = sshll.u32 [#allocation7], 4
      %s1872 = int_to_ptr.vmem [resolvable:$true] %s1871
      %1874 = dma.vmem_to_hbm [thread:$0]  %s1872, 16, %s6, [#allocation8]
    $region40: #{tpu_custom_call.1} parent=1 // pred_fallthru
      _
    // Predicated region
    $region41: #{tpu_custom_call.1} parent=1 // pred_check
      _
    $region42: #{tpu_custom_call.1} parent=1 // pred_check_branch
      %1876 = sbr.rel (0) target = $region44
    $region43: #{tpu_custom_call.1} parent=1 // pred_region
      %s1878 = ssub.s32 16, 16
      %1879 = vsyncadd [#allocation10], %s1878
      %s1881 = sshll.u32 [#allocation9], 4
      %s1882 = int_to_ptr.vmem [resolvable:$true] %s1881
      %1884 = dma.vmem_to_hbm [thread:$0]  %s1882, 16, %s7, [#allocation10]
    $region44: #{tpu_custom_call.1} parent=1 // pred_fallthru
      _
    // Predicated region
    $region45: #{tpu_custom_call.1} parent=1 // pred_check
      _
    $region46: #{tpu_custom_call.1} parent=1 // pred_check_branch
      %1886 = sbr.rel (0) target = $region48
    $region47: #{tpu_custom_call.1} parent=1 // pred_region
      %1887 = dma.done [#allocation8], 16
    $region48: #{tpu_custom_call.1} parent=1 // pred_fallthru
      _
    // Predicated region
    $region49: #{tpu_custom_call.1} parent=1 // pred_check
      _
    $region50: #{tpu_custom_call.1} parent=1 // pred_check_branch
      %1889 = sbr.rel (0) target = $region52
    $region51: #{tpu_custom_call.1} parent=1 // pred_region
      %1890 = dma.done [#allocation10], 16
    $region52: #{tpu_custom_call.1} parent=1 // pred_fallthru
      _
    %1891 = vsyncpa [#allocation8], 1
    %1892 = vsyncpa [#allocation10], 1

</llo_original>
